<compile_context>
chip_gen: v7x
topology: tpu7x:2x2x1
jax: 0.10.0
libtpu: 0.0.40
codegen_flags: <defaults>
</compile_context>

<pallas_src>
import math
import numpy as np
import jax
import jax.numpy as jnp
from jax.experimental import pallas as pl
from jax.experimental.pallas import tpu as pltpu

# ---- hyperparameters (CNNClassifier defaults) ----
KSIZE = 11
PAD = KSIZE // 2
CNN_KERNELS = [16, 32, 64]
MLP_SIZES = [64, 64]
POOL = 2
EPS = 1e-5
SELU_ALPHA = 1.6732632423543772
SELU_SCALE = 1.0507009873554805

# ---- small example problem sizes ----
BATCH = 2
C_IN = 4
SEQ_LEN = 32          # divisible by POOL**2; per-batch lengths stay multiples of 8
NUM_CLASSES = 10


def _selu(x):
    return SELU_SCALE * jnp.where(
        x > 0, x, SELU_ALPHA * (jnp.exp(jnp.minimum(x, 0.0)) - 1.0))


def cnn_classifier_kernel(
    xpad_ref,
    w1_ref, g1_ref, b1_ref,
    w2_ref, g2_ref, b2_ref,
    w3_ref, g3_ref, b3_ref,
    p1_ref, p2_ref,
    wm1_ref, bm1_ref, wm2_ref, bm2_ref,
    wh_ref, bh_ref,
    out_ref,
    col1_ref, pad2_ref, col2_ref, pad3_ref, col3_ref,
):
    batch = xpad_ref.shape[0]

    def conv_bn_selu(pad_ref, col_ref, w_ref, g_ref, b_ref):
        """Conv1d('same', no bias) + BatchNorm1d (batch stats) + SELU.

        pad_ref: (B, L + 2*PAD, Cin) padded input (halo rows already zero)
        col_ref: (B, L, K*Cin) im2col scratch
        w_ref  : (K*Cin, Cout) conv weight
        returns a (B*L, Cout) value (batch folded into the M dimension).
        """
        l_out = col_ref.shape[1]
        cin = pad_ref.shape[2]
        # im2col: K shifted copies feed ONE MXU matmul for the whole layer.
        for k in range(KSIZE):
            col_ref[:, :, k * cin:(k + 1) * cin] = pad_ref[:, k:k + l_out, :]
        col = col_ref[...].reshape(batch * l_out, KSIZE * cin)
        y = jnp.dot(col, w_ref[...], preferred_element_type=jnp.float32)
        # Single-pass training-mode BatchNorm1d statistics (biased variance).
        inv_n = 1.0 / (batch * l_out)
        mean = jnp.sum(y, axis=0, keepdims=True) * inv_n
        var = jnp.sum(y * y, axis=0, keepdims=True) * inv_n - mean * mean
        y = (y - mean) * (g_ref[...] * jax.lax.rsqrt(var + EPS)) + b_ref[...]
        return _selu(y)

    def fill_padded(pad_ref, y_flat):
        """Write a (B*L, C) activation into a (B, L+2*PAD, C) padded scratch,
        zeroing only the halo rows."""
        l = pad_ref.shape[1] - 2 * PAD
        c = pad_ref.shape[2]
        halo = jnp.zeros((batch, PAD, c), jnp.float32)
        pad_ref[:, :PAD, :] = halo
        pad_ref[:, PAD + l:, :] = halo
        pad_ref[:, PAD:PAD + l, :] = y_flat.reshape(batch, l, c)

    # layer 1 (input pre-padded in the wrapper); AvgPool1d(2) as one
    # batch-folded selection matmul consuming y directly from vregs.
    y = conv_bn_selu(xpad_ref, col1_ref, w1_ref, g1_ref, b1_ref)    # (B*L0, 16)
    y = jnp.dot(p1_ref[...], y, preferred_element_type=jnp.float32)  # (B*L1, 16)

    # layer 2
    fill_padded(pad2_ref, y)
    y = conv_bn_selu(pad2_ref, col2_ref, w2_ref, g2_ref, b2_ref)    # (B*L1, 32)
    y = jnp.dot(p2_ref[...], y, preferred_element_type=jnp.float32)  # (B*L2, 32)

    # layer 3 (no pool)
    fill_padded(pad3_ref, y)
    y = conv_bn_selu(pad3_ref, col3_ref, w3_ref, g3_ref, b3_ref)    # (B*L2, 64)

    # global mean over length -> (B, C_last); stays in vregs (no feat scratch).
    l2 = col3_ref.shape[1]
    feat = jnp.mean(y.reshape(batch, l2, y.shape[1]), axis=1)

    # MLP classifier + single head.
    h = _selu(jnp.dot(feat, wm1_ref[...], preferred_element_type=jnp.float32)
              + bm1_ref[...])
    h = _selu(jnp.dot(h, wm2_ref[...], preferred_element_type=jnp.float32)
              + bm2_ref[...])
    logits = jnp.dot(h, wh_ref[...], preferred_element_type=jnp.float32) + bh_ref[...]
    out_ref[...] = logits.astype(out_ref.dtype)


def _pool_matrix(batch, l_in):
    """Batch-folded AvgPool1d(2): one (B*L/2, B*L) selection matrix."""
    rows = batch * (l_in // POOL)
    p = np.zeros((rows, batch * l_in), np.float32)
    r = np.arange(rows)
    base = (r // (l_in // POOL)) * l_in + (r % (l_in // POOL)) * POOL
    p[r, base] = 0.5
    p[r, base + 1] = 0.5
    return jnp.asarray(p)


def cnn_classifier_forward(x_ncl, params):
    # PyTorch NCL -> channels-last (B, L, C); 'same' padding done here.
    x = jnp.transpose(x_ncl, (0, 2, 1)).astype(jnp.float32)
    b, l0, c0 = x.shape
    xpad = jnp.pad(x, ((0, 0), (PAD, PAD), (0, 0)))
    l1, l2 = l0 // POOL, l0 // (POOL * POOL)
    c1, c2, c3 = CNN_KERNELS
    nc = params["wh"].shape[1]

    inputs = (
        xpad,
        params["w1"].reshape(KSIZE * c0, c1), params["g1"], params["b1"],
        params["w2"].reshape(KSIZE * c1, c2), params["g2"], params["b2"],
        params["w3"].reshape(KSIZE * c2, c3), params["g3"], params["b3"],
        _pool_matrix(b, l0), _pool_matrix(b, l1),
        params["wm1"], params["bm1"], params["wm2"], params["bm2"],
        params["wh"], params["bh"],
    )
    vspec = pl.BlockSpec(memory_space=pltpu.MemorySpace.VMEM)
    # No grid: total resident footprint is a few tens of KB.  If B / channels
    # scale up, add a grid over the output-channel axis (BN stats are
    # per-channel, so a Cout split is safe; a batch split is NOT) with
    # dimension_semantics=("parallel",) to engage v7x's second TensorCore.
    return pl.pallas_call(
        cnn_classifier_kernel,
        out_shape=jax.ShapeDtypeStruct((b, nc), jnp.float32),
        in_specs=[vspec] * len(inputs),
        out_specs=vspec,
        scratch_shapes=[
            pltpu.VMEM((b, l0, KSIZE * c0), jnp.float32),        # col1 (im2col)
            pltpu.VMEM((b, l1 + 2 * PAD, c1), jnp.float32),      # padded layer-2 input
            pltpu.VMEM((b, l1, KSIZE * c1), jnp.float32),        # col2
            pltpu.VMEM((b, l2 + 2 * PAD, c2), jnp.float32),      # padded layer-3 input
            pltpu.VMEM((b, l2, KSIZE * c2), jnp.float32),        # col3
        ],
    )(*inputs)


def init_params(key):
    """Deterministic kaiming_uniform_(nonlinearity='linear') init, zero biases,
    BatchNorm gamma=1 / beta=0 (matches CNNClassifier.init_weights)."""
    def ku(k, shape, fan_in):
        bound = math.sqrt(3.0 / fan_in)
        return jax.random.uniform(k, shape, jnp.float32, minval=-bound, maxval=bound)

    keys = jax.random.split(key, 6)
    params = {}
    chans = [C_IN] + CNN_KERNELS
    for i in range(3):
        params[f"w{i+1}"] = ku(keys[i], (KSIZE, chans[i], chans[i + 1]),
                               chans[i] * KSIZE)
        params[f"g{i+1}"] = jnp.ones((1, chans[i + 1]), jnp.float32)
        params[f"b{i+1}"] = jnp.zeros((1, chans[i + 1]), jnp.float32)
    mlp_in = [CNN_KERNELS[-1]] + MLP_SIZES[:-1]
    for i in range(2):
        params[f"wm{i+1}"] = ku(keys[3 + i], (mlp_in[i], MLP_SIZES[i]), mlp_in[i])
        params[f"bm{i+1}"] = jnp.zeros((1, MLP_SIZES[i]), jnp.float32)
    params["wh"] = ku(keys[5], (MLP_SIZES[-1], NUM_CLASSES), MLP_SIZES[-1])
    params["bh"] = jnp.zeros((1, NUM_CLASSES), jnp.float32)
    return params


def reference_forward(x_ncl, params):
    x = jnp.transpose(x_ncl, (0, 2, 1)).astype(jnp.float32)
    layers = [
        (params["w1"], params["g1"], params["b1"], True),
        (params["w2"], params["g2"], params["b2"], True),
        (params["w3"], params["g3"], params["b3"], False),
    ]
    for w, g, b, do_pool in layers:
        bsz, l, _ = x.shape
        xp = jnp.pad(x, ((0, 0), (PAD, PAD), (0, 0)))
        y = jnp.zeros((bsz, l, w.shape[2]), jnp.float32)
        for k in range(KSIZE):
            y = y + jnp.einsum("blc,cd->bld", xp[:, k:k + l, :], w[k])
        mean = y.mean(axis=(0, 1), keepdims=True)
        var = ((y - mean) ** 2).mean(axis=(0, 1), keepdims=True)
        y = g * (y - mean) / jnp.sqrt(var + EPS) + b
        y = _selu(y)
        if do_pool:
            y = y.reshape(bsz, l // POOL, POOL, -1).mean(axis=2)
        x = y
    feat = x.mean(axis=1)
    h = _selu(feat @ params["wm1"] + params["bm1"])
    h = _selu(h @ params["wm2"] + params["bm2"])
    return h @ params["wh"] + params["bh"]


if __name__ == "__main__":
    key = jax.random.PRNGKey(0)
    kx, kp = jax.random.split(key)
    # PyTorch-convention input: (batch, channels, length)
    x = jax.random.normal(kx, (BATCH, C_IN, SEQ_LEN), jnp.float32)
    params = init_params(kp)

    out = cnn_classifier_forward(x, params)
    out = jax.block_until_ready(out)

    ref = reference_forward(x, params)
    assert out.shape == (BATCH, NUM_CLASSES)
    np.testing.assert_allclose(np.asarray(out), np.asarray(ref), rtol=2e-3, atol=2e-3)
    print("KERNEL_OK")
</pallas_src>

<mosaic_0001>
module attributes {stable_mosaic.version = 11 : i64} {
  func.func @cnn_classifier_kernel(%arg0: memref<2x42x4xf32, #tpu.memory_space<vmem>>, %arg1: memref<44x16xf32, #tpu.memory_space<vmem>>, %arg2: memref<1x16xf32, #tpu.memory_space<vmem>>, %arg3: memref<1x16xf32, #tpu.memory_space<vmem>>, %arg4: memref<176x32xf32, #tpu.memory_space<vmem>>, %arg5: memref<1x32xf32, #tpu.memory_space<vmem>>, %arg6: memref<1x32xf32, #tpu.memory_space<vmem>>, %arg7: memref<352x64xf32, #tpu.memory_space<vmem>>, %arg8: memref<1x64xf32, #tpu.memory_space<vmem>>, %arg9: memref<1x64xf32, #tpu.memory_space<vmem>>, %arg10: memref<32x64xf32, #tpu.memory_space<vmem>>, %arg11: memref<16x32xf32, #tpu.memory_space<vmem>>, %arg12: memref<64x64xf32, #tpu.memory_space<vmem>>, %arg13: memref<1x64xf32, #tpu.memory_space<vmem>>, %arg14: memref<64x64xf32, #tpu.memory_space<vmem>>, %arg15: memref<1x64xf32, #tpu.memory_space<vmem>>, %arg16: memref<64x10xf32, #tpu.memory_space<vmem>>, %arg17: memref<1x10xf32, #tpu.memory_space<vmem>>, %arg18: memref<2x10xf32, #tpu.memory_space<vmem>>, %arg19: memref<2x32x44xf32, #tpu.memory_space<vmem>>, %arg20: memref<2x26x16xf32, #tpu.memory_space<vmem>>, %arg21: memref<2x16x176xf32, #tpu.memory_space<vmem>>, %arg22: memref<2x18x32xf32, #tpu.memory_space<vmem>>, %arg23: memref<2x8x352xf32, #tpu.memory_space<vmem>>) attributes {dimension_semantics = [], scalar_prefetch = 0 : i64, scratch_operands = 5 : i64, tpu.core_type = #tpu.core_type<tc>} {
    %c0 = arith.constant 0 : index
    %c0_0 = arith.constant 0 : index
    %c0_1 = arith.constant 0 : index
    %0 = vector.load %arg0[%c0, %c0_0, %c0_1] : memref<2x42x4xf32, #tpu.memory_space<vmem>>, vector<2x32x4xf32>
    %c0_2 = arith.constant 0 : index
    %c0_3 = arith.constant 0 : index
    %c0_4 = arith.constant 0 : index
    %1 = vector.load %arg19[%c0_2, %c0_3, %c0_4] : memref<2x32x44xf32, #tpu.memory_space<vmem>>, vector<2x32x4xf32>
    tpu.vector_store %arg19[%c0_2, %c0_3, %c0_4], %0 {strides = array<i32>} : memref<2x32x44xf32, #tpu.memory_space<vmem>>, vector<2x32x4xf32>,
    %c0_5 = arith.constant 0 : index
    %c1 = arith.constant 1 : index
    %c0_6 = arith.constant 0 : index
    %2 = vector.load %arg0[%c0_5, %c1, %c0_6] : memref<2x42x4xf32, #tpu.memory_space<vmem>>, vector<2x32x4xf32>
    %c0_7 = arith.constant 0 : index
    %c0_8 = arith.constant 0 : index
    %c4 = arith.constant 4 : index
    %3 = vector.load %arg19[%c0_7, %c0_8, %c4] : memref<2x32x44xf32, #tpu.memory_space<vmem>>, vector<2x32x4xf32>
    tpu.vector_store %arg19[%c0_7, %c0_8, %c4], %2 {strides = array<i32>} : memref<2x32x44xf32, #tpu.memory_space<vmem>>, vector<2x32x4xf32>,
    %c0_9 = arith.constant 0 : index
    %c2 = arith.constant 2 : index
    %c0_10 = arith.constant 0 : index
    %4 = vector.load %arg0[%c0_9, %c2, %c0_10] : memref<2x42x4xf32, #tpu.memory_space<vmem>>, vector<2x32x4xf32>
    %c0_11 = arith.constant 0 : index
    %c0_12 = arith.constant 0 : index
    %c8 = arith.constant 8 : index
    %5 = vector.load %arg19[%c0_11, %c0_12, %c8] : memref<2x32x44xf32, #tpu.memory_space<vmem>>, vector<2x32x4xf32>
    tpu.vector_store %arg19[%c0_11, %c0_12, %c8], %4 {strides = array<i32>} : memref<2x32x44xf32, #tpu.memory_space<vmem>>, vector<2x32x4xf32>,
    %c0_13 = arith.constant 0 : index
    %c3 = arith.constant 3 : index
    %c0_14 = arith.constant 0 : index
    %6 = vector.load %arg0[%c0_13, %c3, %c0_14] : memref<2x42x4xf32, #tpu.memory_space<vmem>>, vector<2x32x4xf32>
    %c0_15 = arith.constant 0 : index
    %c0_16 = arith.constant 0 : index
    %c12 = arith.constant 12 : index
    %7 = vector.load %arg19[%c0_15, %c0_16, %c12] : memref<2x32x44xf32, #tpu.memory_space<vmem>>, vector<2x32x4xf32>
    tpu.vector_store %arg19[%c0_15, %c0_16, %c12], %6 {strides = array<i32>} : memref<2x32x44xf32, #tpu.memory_space<vmem>>, vector<2x32x4xf32>,
    %c0_17 = arith.constant 0 : index
    %c4_18 = arith.constant 4 : index
    %c0_19 = arith.constant 0 : index
    %8 = vector.load %arg0[%c0_17, %c4_18, %c0_19] : memref<2x42x4xf32, #tpu.memory_space<vmem>>, vector<2x32x4xf32>
    %c0_20 = arith.constant 0 : index
    %c0_21 = arith.constant 0 : index
    %c16 = arith.constant 16 : index
    %9 = vector.load %arg19[%c0_20, %c0_21, %c16] : memref<2x32x44xf32, #tpu.memory_space<vmem>>, vector<2x32x4xf32>
    tpu.vector_store %arg19[%c0_20, %c0_21, %c16], %8 {strides = array<i32>} : memref<2x32x44xf32, #tpu.memory_space<vmem>>, vector<2x32x4xf32>,
    %c0_22 = arith.constant 0 : index
    %c5 = arith.constant 5 : index
    %c0_23 = arith.constant 0 : index
    %10 = vector.load %arg0[%c0_22, %c5, %c0_23] : memref<2x42x4xf32, #tpu.memory_space<vmem>>, vector<2x32x4xf32>
    %c0_24 = arith.constant 0 : index
    %c0_25 = arith.constant 0 : index
    %c20 = arith.constant 20 : index
    %11 = vector.load %arg19[%c0_24, %c0_25, %c20] : memref<2x32x44xf32, #tpu.memory_space<vmem>>, vector<2x32x4xf32>
    tpu.vector_store %arg19[%c0_24, %c0_25, %c20], %10 {strides = array<i32>} : memref<2x32x44xf32, #tpu.memory_space<vmem>>, vector<2x32x4xf32>,
    %c0_26 = arith.constant 0 : index
    %c6 = arith.constant 6 : index
    %c0_27 = arith.constant 0 : index
    %12 = vector.load %arg0[%c0_26, %c6, %c0_27] : memref<2x42x4xf32, #tpu.memory_space<vmem>>, vector<2x32x4xf32>
    %c0_28 = arith.constant 0 : index
    %c0_29 = arith.constant 0 : index
    %c24 = arith.constant 24 : index
    %13 = vector.load %arg19[%c0_28, %c0_29, %c24] : memref<2x32x44xf32, #tpu.memory_space<vmem>>, vector<2x32x4xf32>
    tpu.vector_store %arg19[%c0_28, %c0_29, %c24], %12 {strides = array<i32>} : memref<2x32x44xf32, #tpu.memory_space<vmem>>, vector<2x32x4xf32>,
    %c0_30 = arith.constant 0 : index
    %c7 = arith.constant 7 : index
    %c0_31 = arith.constant 0 : index
    %14 = vector.load %arg0[%c0_30, %c7, %c0_31] : memref<2x42x4xf32, #tpu.memory_space<vmem>>, vector<2x32x4xf32>
    %c0_32 = arith.constant 0 : index
    %c0_33 = arith.constant 0 : index
    %c28 = arith.constant 28 : index
    %15 = vector.load %arg19[%c0_32, %c0_33, %c28] : memref<2x32x44xf32, #tpu.memory_space<vmem>>, vector<2x32x4xf32>
    tpu.vector_store %arg19[%c0_32, %c0_33, %c28], %14 {strides = array<i32>} : memref<2x32x44xf32, #tpu.memory_space<vmem>>, vector<2x32x4xf32>,
    %c0_34 = arith.constant 0 : index
    %c8_35 = arith.constant 8 : index
    %c0_36 = arith.constant 0 : index
    %16 = vector.load %arg0[%c0_34, %c8_35, %c0_36] : memref<2x42x4xf32, #tpu.memory_space<vmem>>, vector<2x32x4xf32>
    %c0_37 = arith.constant 0 : index
    %c0_38 = arith.constant 0 : index
    %c32 = arith.constant 32 : index
    %17 = vector.load %arg19[%c0_37, %c0_38, %c32] : memref<2x32x44xf32, #tpu.memory_space<vmem>>, vector<2x32x4xf32>
    tpu.vector_store %arg19[%c0_37, %c0_38, %c32], %16 {strides = array<i32>} : memref<2x32x44xf32, #tpu.memory_space<vmem>>, vector<2x32x4xf32>,
    %c0_39 = arith.constant 0 : index
    %c9 = arith.constant 9 : index
    %c0_40 = arith.constant 0 : index
    %18 = vector.load %arg0[%c0_39, %c9, %c0_40] : memref<2x42x4xf32, #tpu.memory_space<vmem>>, vector<2x32x4xf32>
    %c0_41 = arith.constant 0 : index
    %c0_42 = arith.constant 0 : index
    %c36 = arith.constant 36 : index
    %19 = vector.load %arg19[%c0_41, %c0_42, %c36] : memref<2x32x44xf32, #tpu.memory_space<vmem>>, vector<2x32x4xf32>
    tpu.vector_store %arg19[%c0_41, %c0_42, %c36], %18 {strides = array<i32>} : memref<2x32x44xf32, #tpu.memory_space<vmem>>, vector<2x32x4xf32>,
    %c0_43 = arith.constant 0 : index
    %c10 = arith.constant 10 : index
    %c0_44 = arith.constant 0 : index
    %20 = vector.load %arg0[%c0_43, %c10, %c0_44] : memref<2x42x4xf32, #tpu.memory_space<vmem>>, vector<2x32x4xf32>
    %c0_45 = arith.constant 0 : index
    %c0_46 = arith.constant 0 : index
    %c40 = arith.constant 40 : index
    %21 = vector.load %arg19[%c0_45, %c0_46, %c40] : memref<2x32x44xf32, #tpu.memory_space<vmem>>, vector<2x32x4xf32>
    tpu.vector_store %arg19[%c0_45, %c0_46, %c40], %20 {strides = array<i32>} : memref<2x32x44xf32, #tpu.memory_space<vmem>>, vector<2x32x4xf32>,
    %c0_47 = arith.constant 0 : index
    %c0_48 = arith.constant 0 : index
    %c0_49 = arith.constant 0 : index
    %22 = vector.load %arg19[%c0_47, %c0_48, %c0_49] : memref<2x32x44xf32, #tpu.memory_space<vmem>>, vector<2x32x44xf32>
    %23 = vector.shape_cast %22 : vector<2x32x44xf32> to vector<64x44xf32>
    %c0_50 = arith.constant 0 : index
    %c0_51 = arith.constant 0 : index
    %24 = vector.load %arg1[%c0_50, %c0_51] : memref<44x16xf32, #tpu.memory_space<vmem>>, vector<44x16xf32>
    %cst = arith.constant dense<0.000000e+00> : vector<64x16xf32>
    %25 = tpu.matmul %23, %24, %cst {dimension_numbers = #tpu.dot_dimension_numbers<[1], [0], [0], [1], [0, 0, 1, 1], [], []>} : vector<64x44xf32>, vector<44x16xf32>, vector<64x16xf32> -> vector<64x16xf32>
    %cst_52 = arith.constant dense<0.000000e+00> : vector<16xf32>
    %26 = vector.multi_reduction <add>, %25, %cst_52 [0] : vector<64x16xf32> to vector<16xf32>
    %27 = vector.shape_cast %26 : vector<16xf32> to vector<1x16xf32>
    %cst_53 = arith.constant 1.562500e-02 : f32
    %28 = vector.broadcast %cst_53 : f32 to vector<1x16xf32>
    %29 = arith.mulf %27, %28 : vector<1x16xf32>
    %30 = arith.mulf %25, %25 : vector<64x16xf32>
    %cst_54 = arith.constant dense<0.000000e+00> : vector<16xf32>
    %31 = vector.multi_reduction <add>, %30, %cst_54 [0] : vector<64x16xf32> to vector<16xf32>
    %32 = vector.shape_cast %31 : vector<16xf32> to vector<1x16xf32>
    %cst_55 = arith.constant 1.562500e-02 : f32
    %33 = vector.broadcast %cst_55 : f32 to vector<1x16xf32>
    %34 = arith.mulf %32, %33 : vector<1x16xf32>
    %35 = arith.mulf %29, %29 : vector<1x16xf32>
    %36 = arith.subf %34, %35 : vector<1x16xf32>
    %37 = vector.broadcast %29 : vector<1x16xf32> to vector<64x16xf32>
    %38 = arith.subf %25, %37 : vector<64x16xf32>
    %c0_56 = arith.constant 0 : index
    %c0_57 = arith.constant 0 : index
    %39 = vector.load %arg2[%c0_56, %c0_57] : memref<1x16xf32, #tpu.memory_space<vmem>>, vector<1x16xf32>
    %cst_58 = arith.constant 9.99999974E-6 : f32
    %40 = vector.broadcast %cst_58 : f32 to vector<1x16xf32>
    %41 = arith.addf %36, %40 : vector<1x16xf32>
    %42 = math.rsqrt %41 : vector<1x16xf32>
    %43 = arith.mulf %39, %42 : vector<1x16xf32>
    %44 = vector.broadcast %43 : vector<1x16xf32> to vector<64x16xf32>
    %45 = arith.mulf %38, %44 : vector<64x16xf32>
    %c0_59 = arith.constant 0 : index
    %c0_60 = arith.constant 0 : index
    %46 = vector.load %arg3[%c0_59, %c0_60] : memref<1x16xf32, #tpu.memory_space<vmem>>, vector<1x16xf32>
    %47 = vector.broadcast %46 : vector<1x16xf32> to vector<64x16xf32>
    %48 = arith.addf %45, %47 : vector<64x16xf32>
    %cst_61 = arith.constant 0.000000e+00 : f32
    %49 = vector.broadcast %cst_61 : f32 to vector<64x16xf32>
    %50 = arith.cmpf ogt, %48, %49 : vector<64x16xf32>
    %cst_62 = arith.constant 0.000000e+00 : f32
    %51 = vector.broadcast %cst_62 : f32 to vector<64x16xf32>
    %52 = arith.minimumf %48, %51 : vector<64x16xf32>
    %53 = math.exp %52 : vector<64x16xf32>
    %cst_63 = arith.constant 1.000000e+00 : f32
    %54 = vector.broadcast %cst_63 : f32 to vector<64x16xf32>
    %55 = arith.subf %53, %54 : vector<64x16xf32>
    %cst_64 = arith.constant 1.67326319 : f32
    %56 = vector.broadcast %cst_64 : f32 to vector<64x16xf32>
    %57 = arith.mulf %56, %55 : vector<64x16xf32>
    %58 = arith.select %50, %48, %57 : vector<64x16xi1>, vector<64x16xf32>
    %cst_65 = arith.constant 1.05070102 : f32
    %59 = vector.broadcast %cst_65 : f32 to vector<64x16xf32>
    %60 = arith.mulf %59, %58 : vector<64x16xf32>
    %c0_66 = arith.constant 0 : index
    %c0_67 = arith.constant 0 : index
    %61 = vector.load %arg10[%c0_66, %c0_67] : memref<32x64xf32, #tpu.memory_space<vmem>>, vector<32x64xf32>
    %cst_68 = arith.constant dense<0.000000e+00> : vector<32x16xf32>
    %62 = tpu.matmul %61, %60, %cst_68 {dimension_numbers = #tpu.dot_dimension_numbers<[1], [0], [0], [1], [0, 0, 1, 1], [], []>} : vector<32x64xf32>, vector<64x16xf32>, vector<32x16xf32> -> vector<32x16xf32>
    %cst_69 = arith.constant 0.000000e+00 : f32
    %63 = vector.broadcast %cst_69 : f32 to vector<2x5x16xf32>
    %c0_70 = arith.constant 0 : index
    %c0_71 = arith.constant 0 : index
    %c0_72 = arith.constant 0 : index
    %64 = vector.load %arg20[%c0_70, %c0_71, %c0_72] : memref<2x26x16xf32, #tpu.memory_space<vmem>>, vector<2x5x16xf32>
    tpu.vector_store %arg20[%c0_70, %c0_71, %c0_72], %63 {strides = array<i32>} : memref<2x26x16xf32, #tpu.memory_space<vmem>>, vector<2x5x16xf32>,
    %c0_73 = arith.constant 0 : index
    %c21 = arith.constant 21 : index
    %c0_74 = arith.constant 0 : index
    %65 = vector.load %arg20[%c0_73, %c21, %c0_74] : memref<2x26x16xf32, #tpu.memory_space<vmem>>, vector<2x5x16xf32>
    tpu.vector_store %arg20[%c0_73, %c21, %c0_74], %63 {strides = array<i32>} : memref<2x26x16xf32, #tpu.memory_space<vmem>>, vector<2x5x16xf32>,
    %66 = vector.shape_cast %62 : vector<32x16xf32> to vector<2x16x16xf32>
    %c0_75 = arith.constant 0 : index
    %c5_76 = arith.constant 5 : index
    %c0_77 = arith.constant 0 : index
    %67 = vector.load %arg20[%c0_75, %c5_76, %c0_77] : memref<2x26x16xf32, #tpu.memory_space<vmem>>, vector<2x16x16xf32>
    tpu.vector_store %arg20[%c0_75, %c5_76, %c0_77], %66 {strides = array<i32>} : memref<2x26x16xf32, #tpu.memory_space<vmem>>, vector<2x16x16xf32>,
    %c0_78 = arith.constant 0 : index
    %c0_79 = arith.constant 0 : index
    %c0_80 = arith.constant 0 : index
    %68 = vector.load %arg20[%c0_78, %c0_79, %c0_80] : memref<2x26x16xf32, #tpu.memory_space<vmem>>, vector<2x16x16xf32>
    %c0_81 = arith.constant 0 : index
    %c0_82 = arith.constant 0 : index
    %c0_83 = arith.constant 0 : index
    %69 = vector.load %arg21[%c0_81, %c0_82, %c0_83] : memref<2x16x176xf32, #tpu.memory_space<vmem>>, vector<2x16x16xf32>
    tpu.vector_store %arg21[%c0_81, %c0_82, %c0_83], %68 {strides = array<i32>} : memref<2x16x176xf32, #tpu.memory_space<vmem>>, vector<2x16x16xf32>,
    %c0_84 = arith.constant 0 : index
    %c1_85 = arith.constant 1 : index
    %c0_86 = arith.constant 0 : index
    %70 = vector.load %arg20[%c0_84, %c1_85, %c0_86] : memref<2x26x16xf32, #tpu.memory_space<vmem>>, vector<2x16x16xf32>
    %c0_87 = arith.constant 0 : index
    %c0_88 = arith.constant 0 : index
    %c16_89 = arith.constant 16 : index
    %71 = vector.load %arg21[%c0_87, %c0_88, %c16_89] : memref<2x16x176xf32, #tpu.memory_space<vmem>>, vector<2x16x16xf32>
    tpu.vector_store %arg21[%c0_87, %c0_88, %c16_89], %70 {strides = array<i32>} : memref<2x16x176xf32, #tpu.memory_space<vmem>>, vector<2x16x16xf32>,
    %c0_90 = arith.constant 0 : index
    %c2_91 = arith.constant 2 : index
    %c0_92 = arith.constant 0 : index
    %72 = vector.load %arg20[%c0_90, %c2_91, %c0_92] : memref<2x26x16xf32, #tpu.memory_space<vmem>>, vector<2x16x16xf32>
    %c0_93 = arith.constant 0 : index
    %c0_94 = arith.constant 0 : index
    %c32_95 = arith.constant 32 : index
    %73 = vector.load %arg21[%c0_93, %c0_94, %c32_95] : memref<2x16x176xf32, #tpu.memory_space<vmem>>, vector<2x16x16xf32>
    tpu.vector_store %arg21[%c0_93, %c0_94, %c32_95], %72 {strides = array<i32>} : memref<2x16x176xf32, #tpu.memory_space<vmem>>, vector<2x16x16xf32>,
    %c0_96 = arith.constant 0 : index
    %c3_97 = arith.constant 3 : index
    %c0_98 = arith.constant 0 : index
    %74 = vector.load %arg20[%c0_96, %c3_97, %c0_98] : memref<2x26x16xf32, #tpu.memory_space<vmem>>, vector<2x16x16xf32>
    %c0_99 = arith.constant 0 : index
    %c0_100 = arith.constant 0 : index
    %c48 = arith.constant 48 : index
    %75 = vector.load %arg21[%c0_99, %c0_100, %c48] : memref<2x16x176xf32, #tpu.memory_space<vmem>>, vector<2x16x16xf32>
    tpu.vector_store %arg21[%c0_99, %c0_100, %c48], %74 {strides = array<i32>} : memref<2x16x176xf32, #tpu.memory_space<vmem>>, vector<2x16x16xf32>,
    %c0_101 = arith.constant 0 : index
    %c4_102 = arith.constant 4 : index
    %c0_103 = arith.constant 0 : index
    %76 = vector.load %arg20[%c0_101, %c4_102, %c0_103] : memref<2x26x16xf32, #tpu.memory_space<vmem>>, vector<2x16x16xf32>
    %c0_104 = arith.constant 0 : index
    %c0_105 = arith.constant 0 : index
    %c64 = arith.constant 64 : index
    %77 = vector.load %arg21[%c0_104, %c0_105, %c64] : memref<2x16x176xf32, #tpu.memory_space<vmem>>, vector<2x16x16xf32>
    tpu.vector_store %arg21[%c0_104, %c0_105, %c64], %76 {strides = array<i32>} : memref<2x16x176xf32, #tpu.memory_space<vmem>>, vector<2x16x16xf32>,
    %c0_106 = arith.constant 0 : index
    %c5_107 = arith.constant 5 : index
    %c0_108 = arith.constant 0 : index
    %78 = vector.load %arg20[%c0_106, %c5_107, %c0_108] : memref<2x26x16xf32, #tpu.memory_space<vmem>>, vector<2x16x16xf32>
    %c0_109 = arith.constant 0 : index
    %c0_110 = arith.constant 0 : index
    %c80 = arith.constant 80 : index
    %79 = vector.load %arg21[%c0_109, %c0_110, %c80] : memref<2x16x176xf32, #tpu.memory_space<vmem>>, vector<2x16x16xf32>
    tpu.vector_store %arg21[%c0_109, %c0_110, %c80], %78 {strides = array<i32>} : memref<2x16x176xf32, #tpu.memory_space<vmem>>, vector<2x16x16xf32>,
    %c0_111 = arith.constant 0 : index
    %c6_112 = arith.constant 6 : index
    %c0_113 = arith.constant 0 : index
    %80 = vector.load %arg20[%c0_111, %c6_112, %c0_113] : memref<2x26x16xf32, #tpu.memory_space<vmem>>, vector<2x16x16xf32>
    %c0_114 = arith.constant 0 : index
    %c0_115 = arith.constant 0 : index
    %c96 = arith.constant 96 : index
    %81 = vector.load %arg21[%c0_114, %c0_115, %c96] : memref<2x16x176xf32, #tpu.memory_space<vmem>>, vector<2x16x16xf32>
    tpu.vector_store %arg21[%c0_114, %c0_115, %c96], %80 {strides = array<i32>} : memref<2x16x176xf32, #tpu.memory_space<vmem>>, vector<2x16x16xf32>,
    %c0_116 = arith.constant 0 : index
    %c7_117 = arith.constant 7 : index
    %c0_118 = arith.constant 0 : index
    %82 = vector.load %arg20[%c0_116, %c7_117, %c0_118] : memref<2x26x16xf32, #tpu.memory_space<vmem>>, vector<2x16x16xf32>
    %c0_119 = arith.constant 0 : index
    %c0_120 = arith.constant 0 : index
    %c112 = arith.constant 112 : index
    %83 = vector.load %arg21[%c0_119, %c0_120, %c112] : memref<2x16x176xf32, #tpu.memory_space<vmem>>, vector<2x16x16xf32>
    tpu.vector_store %arg21[%c0_119, %c0_120, %c112], %82 {strides = array<i32>} : memref<2x16x176xf32, #tpu.memory_space<vmem>>, vector<2x16x16xf32>,
    %c0_121 = arith.constant 0 : index
    %c8_122 = arith.constant 8 : index
    %c0_123 = arith.constant 0 : index
    %84 = vector.load %arg20[%c0_121, %c8_122, %c0_123] : memref<2x26x16xf32, #tpu.memory_space<vmem>>, vector<2x16x16xf32>
    %c0_124 = arith.constant 0 : index
    %c0_125 = arith.constant 0 : index
    %c128 = arith.constant 128 : index
    %85 = vector.load %arg21[%c0_124, %c0_125, %c128] : memref<2x16x176xf32, #tpu.memory_space<vmem>>, vector<2x16x16xf32>
    tpu.vector_store %arg21[%c0_124, %c0_125, %c128], %84 {strides = array<i32>} : memref<2x16x176xf32, #tpu.memory_space<vmem>>, vector<2x16x16xf32>,
    %c0_126 = arith.constant 0 : index
    %c9_127 = arith.constant 9 : index
    %c0_128 = arith.constant 0 : index
    %86 = vector.load %arg20[%c0_126, %c9_127, %c0_128] : memref<2x26x16xf32, #tpu.memory_space<vmem>>, vector<2x16x16xf32>
    %c0_129 = arith.constant 0 : index
    %c0_130 = arith.constant 0 : index
    %c144 = arith.constant 144 : index
    %87 = vector.load %arg21[%c0_129, %c0_130, %c144] : memref<2x16x176xf32, #tpu.memory_space<vmem>>, vector<2x16x16xf32>
    tpu.vector_store %arg21[%c0_129, %c0_130, %c144], %86 {strides = array<i32>} : memref<2x16x176xf32, #tpu.memory_space<vmem>>, vector<2x16x16xf32>,
    %c0_131 = arith.constant 0 : index
    %c10_132 = arith.constant 10 : index
    %c0_133 = arith.constant 0 : index
    %88 = vector.load %arg20[%c0_131, %c10_132, %c0_133] : memref<2x26x16xf32, #tpu.memory_space<vmem>>, vector<2x16x16xf32>
    %c0_134 = arith.constant 0 : index
    %c0_135 = arith.constant 0 : index
    %c160 = arith.constant 160 : index
    %89 = vector.load %arg21[%c0_134, %c0_135, %c160] : memref<2x16x176xf32, #tpu.memory_space<vmem>>, vector<2x16x16xf32>
    tpu.vector_store %arg21[%c0_134, %c0_135, %c160], %88 {strides = array<i32>} : memref<2x16x176xf32, #tpu.memory_space<vmem>>, vector<2x16x16xf32>,
    %c0_136 = arith.constant 0 : index
    %c0_137 = arith.constant 0 : index
    %c0_138 = arith.constant 0 : index
    %90 = vector.load %arg21[%c0_136, %c0_137, %c0_138] : memref<2x16x176xf32, #tpu.memory_space<vmem>>, vector<2x16x176xf32>
    %91 = vector.shape_cast %90 : vector<2x16x176xf32> to vector<32x176xf32>
    %c0_139 = arith.constant 0 : index
    %c0_140 = arith.constant 0 : index
    %92 = vector.load %arg4[%c0_139, %c0_140] : memref<176x32xf32, #tpu.memory_space<vmem>>, vector<176x32xf32>
    %cst_141 = arith.constant dense<0.000000e+00> : vector<32x32xf32>
    %93 = tpu.matmul %91, %92, %cst_141 {dimension_numbers = #tpu.dot_dimension_numbers<[1], [0], [0], [1], [0, 0, 1, 1], [], []>} : vector<32x176xf32>, vector<176x32xf32>, vector<32x32xf32> -> vector<32x32xf32>
    %cst_142 = arith.constant dense<0.000000e+00> : vector<32xf32>
    %94 = vector.multi_reduction <add>, %93, %cst_142 [0] : vector<32x32xf32> to vector<32xf32>
    %95 = vector.shape_cast %94 : vector<32xf32> to vector<1x32xf32>
    %cst_143 = arith.constant 3.125000e-02 : f32
    %96 = vector.broadcast %cst_143 : f32 to vector<1x32xf32>
    %97 = arith.mulf %95, %96 : vector<1x32xf32>
    %98 = arith.mulf %93, %93 : vector<32x32xf32>
    %cst_144 = arith.constant dense<0.000000e+00> : vector<32xf32>
    %99 = vector.multi_reduction <add>, %98, %cst_144 [0] : vector<32x32xf32> to vector<32xf32>
    %100 = vector.shape_cast %99 : vector<32xf32> to vector<1x32xf32>
    %cst_145 = arith.constant 3.125000e-02 : f32
    %101 = vector.broadcast %cst_145 : f32 to vector<1x32xf32>
    %102 = arith.mulf %100, %101 : vector<1x32xf32>
    %103 = arith.mulf %97, %97 : vector<1x32xf32>
    %104 = arith.subf %102, %103 : vector<1x32xf32>
    %105 = vector.broadcast %97 : vector<1x32xf32> to vector<32x32xf32>
    %106 = arith.subf %93, %105 : vector<32x32xf32>
    %c0_146 = arith.constant 0 : index
    %c0_147 = arith.constant 0 : index
    %107 = vector.load %arg5[%c0_146, %c0_147] : memref<1x32xf32, #tpu.memory_space<vmem>>, vector<1x32xf32>
    %cst_148 = arith.constant 9.99999974E-6 : f32
    %108 = vector.broadcast %cst_148 : f32 to vector<1x32xf32>
    %109 = arith.addf %104, %108 : vector<1x32xf32>
    %110 = math.rsqrt %109 : vector<1x32xf32>
    %111 = arith.mulf %107, %110 : vector<1x32xf32>
    %112 = vector.broadcast %111 : vector<1x32xf32> to vector<32x32xf32>
    %113 = arith.mulf %106, %112 : vector<32x32xf32>
    %c0_149 = arith.constant 0 : index
    %c0_150 = arith.constant 0 : index
    %114 = vector.load %arg6[%c0_149, %c0_150] : memref<1x32xf32, #tpu.memory_space<vmem>>, vector<1x32xf32>
    %115 = vector.broadcast %114 : vector<1x32xf32> to vector<32x32xf32>
    %116 = arith.addf %113, %115 : vector<32x32xf32>
    %cst_151 = arith.constant 0.000000e+00 : f32
    %117 = vector.broadcast %cst_151 : f32 to vector<32x32xf32>
    %118 = arith.cmpf ogt, %116, %117 : vector<32x32xf32>
    %cst_152 = arith.constant 0.000000e+00 : f32
    %119 = vector.broadcast %cst_152 : f32 to vector<32x32xf32>
    %120 = arith.minimumf %116, %119 : vector<32x32xf32>
    %121 = math.exp %120 : vector<32x32xf32>
    %cst_153 = arith.constant 1.000000e+00 : f32
    %122 = vector.broadcast %cst_153 : f32 to vector<32x32xf32>
    %123 = arith.subf %121, %122 : vector<32x32xf32>
    %cst_154 = arith.constant 1.67326319 : f32
    %124 = vector.broadcast %cst_154 : f32 to vector<32x32xf32>
    %125 = arith.mulf %124, %123 : vector<32x32xf32>
    %126 = arith.select %118, %116, %125 : vector<32x32xi1>, vector<32x32xf32>
    %cst_155 = arith.constant 1.05070102 : f32
    %127 = vector.broadcast %cst_155 : f32 to vector<32x32xf32>
    %128 = arith.mulf %127, %126 : vector<32x32xf32>
    %c0_156 = arith.constant 0 : index
    %c0_157 = arith.constant 0 : index
    %129 = vector.load %arg11[%c0_156, %c0_157] : memref<16x32xf32, #tpu.memory_space<vmem>>, vector<16x32xf32>
    %cst_158 = arith.constant dense<0.000000e+00> : vector<16x32xf32>
    %130 = tpu.matmul %129, %128, %cst_158 {dimension_numbers = #tpu.dot_dimension_numbers<[1], [0], [0], [1], [0, 0, 1, 1], [], []>} : vector<16x32xf32>, vector<32x32xf32>, vector<16x32xf32> -> vector<16x32xf32>
    %cst_159 = arith.constant 0.000000e+00 : f32
    %131 = vector.broadcast %cst_159 : f32 to vector<2x5x32xf32>
    %c0_160 = arith.constant 0 : index
    %c0_161 = arith.constant 0 : index
    %c0_162 = arith.constant 0 : index
    %132 = vector.load %arg22[%c0_160, %c0_161, %c0_162] : memref<2x18x32xf32, #tpu.memory_space<vmem>>, vector<2x5x32xf32>
    tpu.vector_store %arg22[%c0_160, %c0_161, %c0_162], %131 {strides = array<i32>} : memref<2x18x32xf32, #tpu.memory_space<vmem>>, vector<2x5x32xf32>,
    %c0_163 = arith.constant 0 : index
    %c13 = arith.constant 13 : index
    %c0_164 = arith.constant 0 : index
    %133 = vector.load %arg22[%c0_163, %c13, %c0_164] : memref<2x18x32xf32, #tpu.memory_space<vmem>>, vector<2x5x32xf32>
    tpu.vector_store %arg22[%c0_163, %c13, %c0_164], %131 {strides = array<i32>} : memref<2x18x32xf32, #tpu.memory_space<vmem>>, vector<2x5x32xf32>,
    %134 = vector.shape_cast %130 : vector<16x32xf32> to vector<2x8x32xf32>
    %c0_165 = arith.constant 0 : index
    %c5_166 = arith.constant 5 : index
    %c0_167 = arith.constant 0 : index
    %135 = vector.load %arg22[%c0_165, %c5_166, %c0_167] : memref<2x18x32xf32, #tpu.memory_space<vmem>>, vector<2x8x32xf32>
    tpu.vector_store %arg22[%c0_165, %c5_166, %c0_167], %134 {strides = array<i32>} : memref<2x18x32xf32, #tpu.memory_space<vmem>>, vector<2x8x32xf32>,
    %c0_168 = arith.constant 0 : index
    %c0_169 = arith.constant 0 : index
    %c0_170 = arith.constant 0 : index
    %136 = vector.load %arg22[%c0_168, %c0_169, %c0_170] : memref<2x18x32xf32, #tpu.memory_space<vmem>>, vector<2x8x32xf32>
    %c0_171 = arith.constant 0 : index
    %c0_172 = arith.constant 0 : index
    %c0_173 = arith.constant 0 : index
    %137 = vector.load %arg23[%c0_171, %c0_172, %c0_173] : memref<2x8x352xf32, #tpu.memory_space<vmem>>, vector<2x8x32xf32>
    tpu.vector_store %arg23[%c0_171, %c0_172, %c0_173], %136 {strides = array<i32>} : memref<2x8x352xf32, #tpu.memory_space<vmem>>, vector<2x8x32xf32>,
    %c0_174 = arith.constant 0 : index
    %c1_175 = arith.constant 1 : index
    %c0_176 = arith.constant 0 : index
    %138 = vector.load %arg22[%c0_174, %c1_175, %c0_176] : memref<2x18x32xf32, #tpu.memory_space<vmem>>, vector<2x8x32xf32>
    %c0_177 = arith.constant 0 : index
    %c0_178 = arith.constant 0 : index
    %c32_179 = arith.constant 32 : index
    %139 = vector.load %arg23[%c0_177, %c0_178, %c32_179] : memref<2x8x352xf32, #tpu.memory_space<vmem>>, vector<2x8x32xf32>
    tpu.vector_store %arg23[%c0_177, %c0_178, %c32_179], %138 {strides = array<i32>} : memref<2x8x352xf32, #tpu.memory_space<vmem>>, vector<2x8x32xf32>,
    %c0_180 = arith.constant 0 : index
    %c2_181 = arith.constant 2 : index
    %c0_182 = arith.constant 0 : index
    %140 = vector.load %arg22[%c0_180, %c2_181, %c0_182] : memref<2x18x32xf32, #tpu.memory_space<vmem>>, vector<2x8x32xf32>
    %c0_183 = arith.constant 0 : index
    %c0_184 = arith.constant 0 : index
    %c64_185 = arith.constant 64 : index
    %141 = vector.load %arg23[%c0_183, %c0_184, %c64_185] : memref<2x8x352xf32, #tpu.memory_space<vmem>>, vector<2x8x32xf32>
    tpu.vector_store %arg23[%c0_183, %c0_184, %c64_185], %140 {strides = array<i32>} : memref<2x8x352xf32, #tpu.memory_space<vmem>>, vector<2x8x32xf32>,
    %c0_186 = arith.constant 0 : index
    %c3_187 = arith.constant 3 : index
    %c0_188 = arith.constant 0 : index
    %142 = vector.load %arg22[%c0_186, %c3_187, %c0_188] : memref<2x18x32xf32, #tpu.memory_space<vmem>>, vector<2x8x32xf32>
    %c0_189 = arith.constant 0 : index
    %c0_190 = arith.constant 0 : index
    %c96_191 = arith.constant 96 : index
    %143 = vector.load %arg23[%c0_189, %c0_190, %c96_191] : memref<2x8x352xf32, #tpu.memory_space<vmem>>, vector<2x8x32xf32>
    tpu.vector_store %arg23[%c0_189, %c0_190, %c96_191], %142 {strides = array<i32>} : memref<2x8x352xf32, #tpu.memory_space<vmem>>, vector<2x8x32xf32>,
    %c0_192 = arith.constant 0 : index
    %c4_193 = arith.constant 4 : index
    %c0_194 = arith.constant 0 : index
    %144 = vector.load %arg22[%c0_192, %c4_193, %c0_194] : memref<2x18x32xf32, #tpu.memory_space<vmem>>, vector<2x8x32xf32>
    %c0_195 = arith.constant 0 : index
    %c0_196 = arith.constant 0 : index
    %c128_197 = arith.constant 128 : index
    %145 = vector.load %arg23[%c0_195, %c0_196, %c128_197] : memref<2x8x352xf32, #tpu.memory_space<vmem>>, vector<2x8x32xf32>
    tpu.vector_store %arg23[%c0_195, %c0_196, %c128_197], %144 {strides = array<i32>} : memref<2x8x352xf32, #tpu.memory_space<vmem>>, vector<2x8x32xf32>,
    %c0_198 = arith.constant 0 : index
    %c5_199 = arith.constant 5 : index
    %c0_200 = arith.constant 0 : index
    %146 = vector.load %arg22[%c0_198, %c5_199, %c0_200] : memref<2x18x32xf32, #tpu.memory_space<vmem>>, vector<2x8x32xf32>
    %c0_201 = arith.constant 0 : index
    %c0_202 = arith.constant 0 : index
    %c160_203 = arith.constant 160 : index
    %147 = vector.load %arg23[%c0_201, %c0_202, %c160_203] : memref<2x8x352xf32, #tpu.memory_space<vmem>>, vector<2x8x32xf32>
    tpu.vector_store %arg23[%c0_201, %c0_202, %c160_203], %146 {strides = array<i32>} : memref<2x8x352xf32, #tpu.memory_space<vmem>>, vector<2x8x32xf32>,
    %c0_204 = arith.constant 0 : index
    %c6_205 = arith.constant 6 : index
    %c0_206 = arith.constant 0 : index
    %148 = vector.load %arg22[%c0_204, %c6_205, %c0_206] : memref<2x18x32xf32, #tpu.memory_space<vmem>>, vector<2x8x32xf32>
    %c0_207 = arith.constant 0 : index
    %c0_208 = arith.constant 0 : index
    %c192 = arith.constant 192 : index
    %149 = vector.load %arg23[%c0_207, %c0_208, %c192] : memref<2x8x352xf32, #tpu.memory_space<vmem>>, vector<2x8x32xf32>
    tpu.vector_store %arg23[%c0_207, %c0_208, %c192], %148 {strides = array<i32>} : memref<2x8x352xf32, #tpu.memory_space<vmem>>, vector<2x8x32xf32>,
    %c0_209 = arith.constant 0 : index
    %c7_210 = arith.constant 7 : index
    %c0_211 = arith.constant 0 : index
    %150 = vector.load %arg22[%c0_209, %c7_210, %c0_211] : memref<2x18x32xf32, #tpu.memory_space<vmem>>, vector<2x8x32xf32>
    %c0_212 = arith.constant 0 : index
    %c0_213 = arith.constant 0 : index
    %c224 = arith.constant 224 : index
    %151 = vector.load %arg23[%c0_212, %c0_213, %c224] : memref<2x8x352xf32, #tpu.memory_space<vmem>>, vector<2x8x32xf32>
    tpu.vector_store %arg23[%c0_212, %c0_213, %c224], %150 {strides = array<i32>} : memref<2x8x352xf32, #tpu.memory_space<vmem>>, vector<2x8x32xf32>,
    %c0_214 = arith.constant 0 : index
    %c8_215 = arith.constant 8 : index
    %c0_216 = arith.constant 0 : index
    %152 = vector.load %arg22[%c0_214, %c8_215, %c0_216] : memref<2x18x32xf32, #tpu.memory_space<vmem>>, vector<2x8x32xf32>
    %c0_217 = arith.constant 0 : index
    %c0_218 = arith.constant 0 : index
    %c256 = arith.constant 256 : index
    %153 = vector.load %arg23[%c0_217, %c0_218, %c256] : memref<2x8x352xf32, #tpu.memory_space<vmem>>, vector<2x8x32xf32>
    tpu.vector_store %arg23[%c0_217, %c0_218, %c256], %152 {strides = array<i32>} : memref<2x8x352xf32, #tpu.memory_space<vmem>>, vector<2x8x32xf32>,
    %c0_219 = arith.constant 0 : index
    %c9_220 = arith.constant 9 : index
    %c0_221 = arith.constant 0 : index
    %154 = vector.load %arg22[%c0_219, %c9_220, %c0_221] : memref<2x18x32xf32, #tpu.memory_space<vmem>>, vector<2x8x32xf32>
    %c0_222 = arith.constant 0 : index
    %c0_223 = arith.constant 0 : index
    %c288 = arith.constant 288 : index
    %155 = vector.load %arg23[%c0_222, %c0_223, %c288] : memref<2x8x352xf32, #tpu.memory_space<vmem>>, vector<2x8x32xf32>
    tpu.vector_store %arg23[%c0_222, %c0_223, %c288], %154 {strides = array<i32>} : memref<2x8x352xf32, #tpu.memory_space<vmem>>, vector<2x8x32xf32>,
    %c0_224 = arith.constant 0 : index
    %c10_225 = arith.constant 10 : index
    %c0_226 = arith.constant 0 : index
    %156 = vector.load %arg22[%c0_224, %c10_225, %c0_226] : memref<2x18x32xf32, #tpu.memory_space<vmem>>, vector<2x8x32xf32>
    %c0_227 = arith.constant 0 : index
    %c0_228 = arith.constant 0 : index
    %c320 = arith.constant 320 : index
    %157 = vector.load %arg23[%c0_227, %c0_228, %c320] : memref<2x8x352xf32, #tpu.memory_space<vmem>>, vector<2x8x32xf32>
    tpu.vector_store %arg23[%c0_227, %c0_228, %c320], %156 {strides = array<i32>} : memref<2x8x352xf32, #tpu.memory_space<vmem>>, vector<2x8x32xf32>,
    %c0_229 = arith.constant 0 : index
    %c0_230 = arith.constant 0 : index
    %c0_231 = arith.constant 0 : index
    %158 = vector.load %arg23[%c0_229, %c0_230, %c0_231] : memref<2x8x352xf32, #tpu.memory_space<vmem>>, vector<2x8x352xf32>
    %159 = vector.shape_cast %158 : vector<2x8x352xf32> to vector<16x352xf32>
    %c0_232 = arith.constant 0 : index
    %c0_233 = arith.constant 0 : index
    %160 = vector.load %arg7[%c0_232, %c0_233] : memref<352x64xf32, #tpu.memory_space<vmem>>, vector<352x64xf32>
    %cst_234 = arith.constant dense<0.000000e+00> : vector<16x64xf32>
    %161 = tpu.matmul %159, %160, %cst_234 {dimension_numbers = #tpu.dot_dimension_numbers<[1], [0], [0], [1], [0, 0, 1, 1], [], []>} : vector<16x352xf32>, vector<352x64xf32>, vector<16x64xf32> -> vector<16x64xf32>
    %cst_235 = arith.constant dense<0.000000e+00> : vector<64xf32>
    %162 = vector.multi_reduction <add>, %161, %cst_235 [0] : vector<16x64xf32> to vector<64xf32>
    %163 = vector.shape_cast %162 : vector<64xf32> to vector<1x64xf32>
    %cst_236 = arith.constant 6.250000e-02 : f32
    %164 = vector.broadcast %cst_236 : f32 to vector<1x64xf32>
    %165 = arith.mulf %163, %164 : vector<1x64xf32>
    %166 = arith.mulf %161, %161 : vector<16x64xf32>
    %cst_237 = arith.constant dense<0.000000e+00> : vector<64xf32>
    %167 = vector.multi_reduction <add>, %166, %cst_237 [0] : vector<16x64xf32> to vector<64xf32>
    %168 = vector.shape_cast %167 : vector<64xf32> to vector<1x64xf32>
    %cst_238 = arith.constant 6.250000e-02 : f32
    %169 = vector.broadcast %cst_238 : f32 to vector<1x64xf32>
    %170 = arith.mulf %168, %169 : vector<1x64xf32>
    %171 = arith.mulf %165, %165 : vector<1x64xf32>
    %172 = arith.subf %170, %171 : vector<1x64xf32>
    %173 = vector.broadcast %165 : vector<1x64xf32> to vector<16x64xf32>
    %174 = arith.subf %161, %173 : vector<16x64xf32>
    %c0_239 = arith.constant 0 : index
    %c0_240 = arith.constant 0 : index
    %175 = vector.load %arg8[%c0_239, %c0_240] : memref<1x64xf32, #tpu.memory_space<vmem>>, vector<1x64xf32>
    %cst_241 = arith.constant 9.99999974E-6 : f32
    %176 = vector.broadcast %cst_241 : f32 to vector<1x64xf32>
    %177 = arith.addf %172, %176 : vector<1x64xf32>
    %178 = math.rsqrt %177 : vector<1x64xf32>
    %179 = arith.mulf %175, %178 : vector<1x64xf32>
    %180 = vector.broadcast %179 : vector<1x64xf32> to vector<16x64xf32>
    %181 = arith.mulf %174, %180 : vector<16x64xf32>
    %c0_242 = arith.constant 0 : index
    %c0_243 = arith.constant 0 : index
    %182 = vector.load %arg9[%c0_242, %c0_243] : memref<1x64xf32, #tpu.memory_space<vmem>>, vector<1x64xf32>
    %183 = vector.broadcast %182 : vector<1x64xf32> to vector<16x64xf32>
    %184 = arith.addf %181, %183 : vector<16x64xf32>
    %cst_244 = arith.constant 0.000000e+00 : f32
    %185 = vector.broadcast %cst_244 : f32 to vector<16x64xf32>
    %186 = arith.cmpf ogt, %184, %185 : vector<16x64xf32>
    %cst_245 = arith.constant 0.000000e+00 : f32
    %187 = vector.broadcast %cst_245 : f32 to vector<16x64xf32>
    %188 = arith.minimumf %184, %187 : vector<16x64xf32>
    %189 = math.exp %188 : vector<16x64xf32>
    %cst_246 = arith.constant 1.000000e+00 : f32
    %190 = vector.broadcast %cst_246 : f32 to vector<16x64xf32>
    %191 = arith.subf %189, %190 : vector<16x64xf32>
    %cst_247 = arith.constant 1.67326319 : f32
    %192 = vector.broadcast %cst_247 : f32 to vector<16x64xf32>
    %193 = arith.mulf %192, %191 : vector<16x64xf32>
    %194 = arith.select %186, %184, %193 : vector<16x64xi1>, vector<16x64xf32>
    %cst_248 = arith.constant 1.05070102 : f32
    %195 = vector.broadcast %cst_248 : f32 to vector<16x64xf32>
    %196 = arith.mulf %195, %194 : vector<16x64xf32>
    %197 = vector.shape_cast %196 : vector<16x64xf32> to vector<2x8x64xf32>
    %cst_249 = arith.constant dense<0.000000e+00> : vector<2x64xf32>
    %198 = vector.multi_reduction <add>, %197, %cst_249 [1] : vector<2x8x64xf32> to vector<2x64xf32>
    %cst_250 = arith.constant 8.000000e+00 : f32
    %199 = vector.broadcast %cst_250 : f32 to vector<2x64xf32>
    %200 = arith.divf %198, %199 : vector<2x64xf32>
    %c0_251 = arith.constant 0 : index
    %c0_252 = arith.constant 0 : index
    %201 = vector.load %arg12[%c0_251, %c0_252] : memref<64x64xf32, #tpu.memory_space<vmem>>, vector<64x64xf32>
    %cst_253 = arith.constant dense<0.000000e+00> : vector<2x64xf32>
    %202 = tpu.matmul %200, %201, %cst_253 {dimension_numbers = #tpu.dot_dimension_numbers<[1], [0], [0], [1], [0, 0, 1, 1], [], []>} : vector<2x64xf32>, vector<64x64xf32>, vector<2x64xf32> -> vector<2x64xf32>
    %c0_254 = arith.constant 0 : index
    %c0_255 = arith.constant 0 : index
    %203 = vector.load %arg13[%c0_254, %c0_255] : memref<1x64xf32, #tpu.memory_space<vmem>>, vector<1x64xf32>
    %204 = vector.broadcast %203 : vector<1x64xf32> to vector<2x64xf32>
    %205 = arith.addf %202, %204 : vector<2x64xf32>
    %cst_256 = arith.constant 0.000000e+00 : f32
    %206 = vector.broadcast %cst_256 : f32 to vector<2x64xf32>
    %207 = arith.cmpf ogt, %205, %206 : vector<2x64xf32>
    %cst_257 = arith.constant 0.000000e+00 : f32
    %208 = vector.broadcast %cst_257 : f32 to vector<2x64xf32>
    %209 = arith.minimumf %205, %208 : vector<2x64xf32>
    %210 = math.exp %209 : vector<2x64xf32>
    %cst_258 = arith.constant 1.000000e+00 : f32
    %211 = vector.broadcast %cst_258 : f32 to vector<2x64xf32>
    %212 = arith.subf %210, %211 : vector<2x64xf32>
    %cst_259 = arith.constant 1.67326319 : f32
    %213 = vector.broadcast %cst_259 : f32 to vector<2x64xf32>
    %214 = arith.mulf %213, %212 : vector<2x64xf32>
    %215 = arith.select %207, %205, %214 : vector<2x64xi1>, vector<2x64xf32>
    %cst_260 = arith.constant 1.05070102 : f32
    %216 = vector.broadcast %cst_260 : f32 to vector<2x64xf32>
    %217 = arith.mulf %216, %215 : vector<2x64xf32>
    %c0_261 = arith.constant 0 : index
    %c0_262 = arith.constant 0 : index
    %218 = vector.load %arg14[%c0_261, %c0_262] : memref<64x64xf32, #tpu.memory_space<vmem>>, vector<64x64xf32>
    %cst_263 = arith.constant dense<0.000000e+00> : vector<2x64xf32>
    %219 = tpu.matmul %217, %218, %cst_263 {dimension_numbers = #tpu.dot_dimension_numbers<[1], [0], [0], [1], [0, 0, 1, 1], [], []>} : vector<2x64xf32>, vector<64x64xf32>, vector<2x64xf32> -> vector<2x64xf32>
    %c0_264 = arith.constant 0 : index
    %c0_265 = arith.constant 0 : index
    %220 = vector.load %arg15[%c0_264, %c0_265] : memref<1x64xf32, #tpu.memory_space<vmem>>, vector<1x64xf32>
    %221 = vector.broadcast %220 : vector<1x64xf32> to vector<2x64xf32>
    %222 = arith.addf %219, %221 : vector<2x64xf32>
    %cst_266 = arith.constant 0.000000e+00 : f32
    %223 = vector.broadcast %cst_266 : f32 to vector<2x64xf32>
    %224 = arith.cmpf ogt, %222, %223 : vector<2x64xf32>
    %cst_267 = arith.constant 0.000000e+00 : f32
    %225 = vector.broadcast %cst_267 : f32 to vector<2x64xf32>
    %226 = arith.minimumf %222, %225 : vector<2x64xf32>
    %227 = math.exp %226 : vector<2x64xf32>
    %cst_268 = arith.constant 1.000000e+00 : f32
    %228 = vector.broadcast %cst_268 : f32 to vector<2x64xf32>
    %229 = arith.subf %227, %228 : vector<2x64xf32>
    %cst_269 = arith.constant 1.67326319 : f32
    %230 = vector.broadcast %cst_269 : f32 to vector<2x64xf32>
    %231 = arith.mulf %230, %229 : vector<2x64xf32>
    %232 = arith.select %224, %222, %231 : vector<2x64xi1>, vector<2x64xf32>
    %cst_270 = arith.constant 1.05070102 : f32
    %233 = vector.broadcast %cst_270 : f32 to vector<2x64xf32>
    %234 = arith.mulf %233, %232 : vector<2x64xf32>
    %c0_271 = arith.constant 0 : index
    %c0_272 = arith.constant 0 : index
    %235 = vector.load %arg16[%c0_271, %c0_272] : memref<64x10xf32, #tpu.memory_space<vmem>>, vector<64x10xf32>
    %cst_273 = arith.constant dense<0.000000e+00> : vector<2x10xf32>
    %236 = tpu.matmul %234, %235, %cst_273 {dimension_numbers = #tpu.dot_dimension_numbers<[1], [0], [0], [1], [0, 0, 1, 1], [], []>} : vector<2x64xf32>, vector<64x10xf32>, vector<2x10xf32> -> vector<2x10xf32>
    %c0_274 = arith.constant 0 : index
    %c0_275 = arith.constant 0 : index
    %237 = vector.load %arg17[%c0_274, %c0_275] : memref<1x10xf32, #tpu.memory_space<vmem>>, vector<1x10xf32>
    %238 = vector.broadcast %237 : vector<1x10xf32> to vector<2x10xf32>
    %239 = arith.addf %236, %238 : vector<2x10xf32>
    %c0_276 = arith.constant 0 : index
    %c0_277 = arith.constant 0 : index
    %240 = vector.load %arg18[%c0_276, %c0_277] : memref<2x10xf32, #tpu.memory_space<vmem>>, vector<2x10xf32>
    tpu.vector_store %arg18[%c0_276, %c0_277], %239 {strides = array<i32>} : memref<2x10xf32, #tpu.memory_space<vmem>>, vector<2x10xf32>,
    return
  }
}

</mosaic_0001>

<llo_original>
// kernel: tpu_custom_call.1
$region0: #{tpu_custom_call.1}
  #allocation0 [shape = 'u32[]', space=smem, size = 0x4, offset = 0x4, fixed_abs, tag = 'smem constant byte address 0x4 - core index']
  #allocation1 [shape = 'u32[144,128]{1,0:T(1,128)}', space=vmem, size = 0x12000, scoped, tag = 'internal scratch']
  #allocation2 [shape = 'f32[2,32,44]{2,1,0:T(8,128)}', space=vmem, size = 0x8000, scoped, tag = 'scratch operand']
  #allocation3 [shape = 'f32[2,26,16]{2,1,0:T(8,128)}', space=vmem, size = 0x8000, scoped, tag = 'scratch operand']
  #allocation4 [shape = 'f32[2,16,176]{2,1,0:T(8,128)}', space=vmem, size = 0x8000, scoped, tag = 'scratch operand']
  #allocation5 [shape = 'f32[2,18,32]{2,1,0:T(8,128)}', space=vmem, size = 0x6000, scoped, tag = 'scratch operand']
  #allocation6 [shape = 'f32[2,8,352]{2,1,0:T(8,128)}', space=vmem, size = 0x6000, scoped, tag = 'scratch operand']
  %s0 = inlined_call_operand.vmem [shape: f32[2,42,4], index: 0, kind: input, shape index: {}]
  %s1 = inlined_call_operand.vmem [shape: f32[44,16], index: 1, kind: input, shape index: {}]
  %s2 = inlined_call_operand.vmem [shape: f32[1,16], index: 2, kind: input, shape index: {}]
  %s3 = inlined_call_operand.vmem [shape: f32[1,16], index: 3, kind: input, shape index: {}]
  %s4 = inlined_call_operand.vmem [shape: f32[176,32], index: 4, kind: input, shape index: {}]
  %s5 = inlined_call_operand.vmem [shape: f32[1,32], index: 5, kind: input, shape index: {}]
  %s6 = inlined_call_operand.vmem [shape: f32[1,32], index: 6, kind: input, shape index: {}]
  %s7 = inlined_call_operand.vmem [shape: f32[352,64], index: 7, kind: input, shape index: {}]
  %s8 = inlined_call_operand.vmem [shape: f32[1,64], index: 8, kind: input, shape index: {}]
  %s9 = inlined_call_operand.vmem [shape: f32[1,64], index: 9, kind: input, shape index: {}]
  %s10 = inlined_call_operand.vmem [shape: f32[32,64], index: 10, kind: input, shape index: {}]
  %s11 = inlined_call_operand.vmem [shape: f32[16,32], index: 11, kind: input, shape index: {}]
  %s12 = inlined_call_operand.vmem [shape: f32[64,64], index: 12, kind: input, shape index: {}]
  %s13 = inlined_call_operand.vmem [shape: f32[1,64], index: 13, kind: input, shape index: {}]
  %s14 = inlined_call_operand.vmem [shape: f32[64,64], index: 14, kind: input, shape index: {}]
  %s15 = inlined_call_operand.vmem [shape: f32[1,64], index: 15, kind: input, shape index: {}]
  %s16 = inlined_call_operand.vmem [shape: f32[64,10], index: 16, kind: input, shape index: {}]
  %s17 = inlined_call_operand.vmem [shape: f32[1,10], index: 17, kind: input, shape index: {}]
  %s18 = inlined_call_operand.hbm [shape: f32[2,10], index: 18, kind: output, shape index: {}]
  %s19 = sld [smem:[#allocation0]]
  $region82: #{tpu_custom_call.1} parent=0
    _
  %s21 = ssub.s32 1, %s19
  %s22 = scalar_select 0, %s21, %s19
  $region1: #{tpu_custom_call.1} parent=0
    #allocation7 [shape = 'u8[1024]{0}', space=vmem, size = 0x400, scoped, tag = 'output window, operand 0, single buffered']
    #allocation8 [shape = 's32[1]{0}', space=sflag, size = 0x4, scoped, tag = 'scoped memory for tpu_custom_call.1']
    %23 = vsyncpa [#allocation8], 0
    // Predicated region
    $region2: #{tpu_custom_call.1} parent=1 // pred_check
      _
    $region3: #{tpu_custom_call.1} parent=1 // pred_check_branch
      %25 = sbr.rel (0) target = $region5
    $region4: #{tpu_custom_call.1} parent=1 // pred_region
      _
    $region5: #{tpu_custom_call.1} parent=1 // pred_fallthru
      _
    // Predicated region
    $region6: #{tpu_custom_call.1} parent=1 // pred_check
      _
    $region7: #{tpu_custom_call.1} parent=1 // pred_check_branch
      %27 = sbr.rel (0) target = $region9
    $region8: #{tpu_custom_call.1} parent=1 // pred_region
      _
    $region9: #{tpu_custom_call.1} parent=1 // pred_fallthru
      _
    // Predicated region
    $region10: #{tpu_custom_call.1} parent=1 // pred_check
      _
    $region11: #{tpu_custom_call.1} parent=1 // pred_check_branch
      %29 = sbr.rel (0) target = $region13
    $region12: #{tpu_custom_call.1} parent=1 // pred_region
      _
    $region13: #{tpu_custom_call.1} parent=1 // pred_fallthru
      _
    // Predicated region
    $region14: #{tpu_custom_call.1} parent=1 // pred_check
      _
    $region15: #{tpu_custom_call.1} parent=1 // pred_check_branch
      %31 = sbr.rel (0) target = $region17
    $region16: #{tpu_custom_call.1} parent=1 // pred_region
      _
    $region17: #{tpu_custom_call.1} parent=1 // pred_fallthru
      _
    // Predicated region
    $region18: #{tpu_custom_call.1} parent=1 // pred_check
      _
    $region19: #{tpu_custom_call.1} parent=1 // pred_check_branch
      %33 = sbr.rel (0) target = $region21
    $region20: #{tpu_custom_call.1} parent=1 // pred_region
      _
    $region21: #{tpu_custom_call.1} parent=1 // pred_fallthru
      _
    // Predicated region
    $region22: #{tpu_custom_call.1} parent=1 // pred_check
      _
    $region23: #{tpu_custom_call.1} parent=1 // pred_check_branch
      %35 = sbr.rel (0) target = $region25
    $region24: #{tpu_custom_call.1} parent=1 // pred_region
      _
    $region25: #{tpu_custom_call.1} parent=1 // pred_fallthru
      _
    // Predicated region
    $region26: #{tpu_custom_call.1} parent=1 // pred_check
      _
    $region27: #{tpu_custom_call.1} parent=1 // pred_check_branch
      %37 = sbr.rel (0) target = $region29
    $region28: #{tpu_custom_call.1} parent=1 // pred_region
      _
    $region29: #{tpu_custom_call.1} parent=1 // pred_fallthru
      _
    // Predicated region
    $region30: #{tpu_custom_call.1} parent=1 // pred_check
      _
    $region31: #{tpu_custom_call.1} parent=1 // pred_check_branch
      %39 = sbr.rel (0) target = $region33
    $region32: #{tpu_custom_call.1} parent=1 // pred_region
      _
    $region33: #{tpu_custom_call.1} parent=1 // pred_fallthru
      _
    // Predicated region
    $region34: #{tpu_custom_call.1} parent=1 // pred_check
      _
    $region35: #{tpu_custom_call.1} parent=1 // pred_check_branch
      %41 = sbr.rel (0) target = $region37
    $region36: #{tpu_custom_call.1} parent=1 // pred_region
      _
    $region37: #{tpu_custom_call.1} parent=1 // pred_fallthru
      _
    // Predicated region
    $region38: #{tpu_custom_call.1} parent=1 // pred_check
      _
    $region39: #{tpu_custom_call.1} parent=1 // pred_check_branch
      %43 = sbr.rel (0) target = $region41
    $region40: #{tpu_custom_call.1} parent=1 // pred_region
      _
    $region41: #{tpu_custom_call.1} parent=1 // pred_fallthru
      _
    // Predicated region
    $region42: #{tpu_custom_call.1} parent=1 // pred_check
      _
    $region43: #{tpu_custom_call.1} parent=1 // pred_check_branch
      %45 = sbr.rel (0) target = $region45
    $region44: #{tpu_custom_call.1} parent=1 // pred_region
      _
    $region45: #{tpu_custom_call.1} parent=1 // pred_fallthru
      _
    // Predicated region
    $region46: #{tpu_custom_call.1} parent=1 // pred_check
      _
    $region47: #{tpu_custom_call.1} parent=1 // pred_check_branch
      %47 = sbr.rel (0) target = $region49
    $region48: #{tpu_custom_call.1} parent=1 // pred_region
      _
    $region49: #{tpu_custom_call.1} parent=1 // pred_fallthru
      _
    // Predicated region
    $region50: #{tpu_custom_call.1} parent=1 // pred_check
      _
    $region51: #{tpu_custom_call.1} parent=1 // pred_check_branch
      %49 = sbr.rel (0) target = $region53
    $region52: #{tpu_custom_call.1} parent=1 // pred_region
      _
    $region53: #{tpu_custom_call.1} parent=1 // pred_fallthru
      _
    // Predicated region
    $region54: #{tpu_custom_call.1} parent=1 // pred_check
      _
    $region55: #{tpu_custom_call.1} parent=1 // pred_check_branch
      %51 = sbr.rel (0) target = $region57
    $region56: #{tpu_custom_call.1} parent=1 // pred_region
      _
    $region57: #{tpu_custom_call.1} parent=1 // pred_fallthru
      _
    // Predicated region
    $region58: #{tpu_custom_call.1} parent=1 // pred_check
      _
    $region59: #{tpu_custom_call.1} parent=1 // pred_check_branch
      %53 = sbr.rel (0) target = $region61
    $region60: #{tpu_custom_call.1} parent=1 // pred_region
      _
    $region61: #{tpu_custom_call.1} parent=1 // pred_fallthru
      _
    // Predicated region
    $region62: #{tpu_custom_call.1} parent=1 // pred_check
      _
    $region63: #{tpu_custom_call.1} parent=1 // pred_check_branch
      %55 = sbr.rel (0) target = $region65
    $region64: #{tpu_custom_call.1} parent=1 // pred_region
      _
    $region65: #{tpu_custom_call.1} parent=1 // pred_fallthru
      _
    // Predicated region
    $region66: #{tpu_custom_call.1} parent=1 // pred_check
      _
    $region67: #{tpu_custom_call.1} parent=1 // pred_check_branch
      %57 = sbr.rel (0) target = $region69
    $region68: #{tpu_custom_call.1} parent=1 // pred_region
      _
    $region69: #{tpu_custom_call.1} parent=1 // pred_fallthru
      _
    // Predicated region
    $region70: #{tpu_custom_call.1} parent=1 // pred_check
      _
    $region71: #{tpu_custom_call.1} parent=1 // pred_check_branch
      %59 = sbr.rel (0) target = $region73
    $region72: #{tpu_custom_call.1} parent=1 // pred_region
      _
    $region73: #{tpu_custom_call.1} parent=1 // pred_fallthru
      _
    %v60 = vld [vmem:[%s0] sm:$0xff]
    %v61 = vld [vmem:[%s0 + $0x8] sm:$0xff]
    %v62 = vld [vmem:[%s0 + $0x10] sm:$0xff]
    %v63 = vld [vmem:[%s0 + $0x18] sm:$0xff]
    %v64 = vld [vmem:[%s0 + $0x30] sm:$0xff]
    %v65 = vld [vmem:[%s0 + $0x38] sm:$0xff]
    %v66 = vld [vmem:[%s0 + $0x40] sm:$0xff]
    %v67 = vld [vmem:[%s0 + $0x48] sm:$0xff]
    %vm68 = vcmask 31744
    %69 = vst.msk [vmem:[#allocation2] sm:$0xff] %vm68, %v60
    %70 = vst.msk [vmem:[#allocation2 + $0x8] sm:$0xff] %vm68, %v61
    %71 = vst.msk [vmem:[#allocation2 + $0x10] sm:$0xff] %vm68, %v62
    %72 = vst.msk [vmem:[#allocation2 + $0x18] sm:$0xff] %vm68, %v63
    %73 = vst.msk [vmem:[#allocation2 + $0x20] sm:$0xff] %vm68, %v64
    %74 = vst.msk [vmem:[#allocation2 + $0x28] sm:$0xff] %vm68, %v65
    %75 = vst.msk [vmem:[#allocation2 + $0x30] sm:$0xff] %vm68, %v66
    %76 = vst.msk [vmem:[#allocation2 + $0x38] sm:$0xff] %vm68, %v67
    %v77 = vld [vmem:[%s0 + $0x1] sm:$0xff]
    %v78 = vld [vmem:[%s0 + $0x9] sm:$0xff]
    %v79 = vld [vmem:[%s0 + $0x11] sm:$0xff]
    %v80 = vld [vmem:[%s0 + $0x19] sm:$0xff]
    %v81 = vld [vmem:[%s0 + $0x31] sm:$0xff]
    %v82 = vld [vmem:[%s0 + $0x39] sm:$0xff]
    %v83 = vld [vmem:[%s0 + $0x41] sm:$0xff]
    %v84 = vld [vmem:[%s0 + $0x49] sm:$0xff]
    %93 = vrot.lane.b32.xlu0 %v77, 4
    %v94 = vpop.permute.xlu0 %93
    %95 = vrot.lane.b32.xlu0 %v78, 4
    %v96 = vpop.permute.xlu0 %95
    %97 = vrot.lane.b32.xlu0 %v79, 4
    %v98 = vpop.permute.xlu0 %97
    %99 = vrot.lane.b32.xlu0 %v80, 4
    %v100 = vpop.permute.xlu0 %99
    %101 = vrot.lane.b32.xlu0 %v81, 4
    %v102 = vpop.permute.xlu0 %101
    %103 = vrot.lane.b32.xlu0 %v82, 4
    %v104 = vpop.permute.xlu0 %103
    %105 = vrot.lane.b32.xlu0 %v83, 4
    %v106 = vpop.permute.xlu0 %105
    %107 = vrot.lane.b32.xlu0 %v84, 4
    %v108 = vpop.permute.xlu0 %107
    %vm117 = vcmask 64544
    %118 = vst.msk [vmem:[#allocation2] sm:$0xff] %vm117, %v94
    %119 = vst.msk [vmem:[#allocation2 + $0x8] sm:$0xff] %vm117, %v96
    %120 = vst.msk [vmem:[#allocation2 + $0x10] sm:$0xff] %vm117, %v98
    %121 = vst.msk [vmem:[#allocation2 + $0x18] sm:$0xff] %vm117, %v100
    %122 = vst.msk [vmem:[#allocation2 + $0x20] sm:$0xff] %vm117, %v102
    %123 = vst.msk [vmem:[#allocation2 + $0x28] sm:$0xff] %vm117, %v104
    %124 = vst.msk [vmem:[#allocation2 + $0x30] sm:$0xff] %vm117, %v106
    %125 = vst.msk [vmem:[#allocation2 + $0x38] sm:$0xff] %vm117, %v108
    %v126 = vld [vmem:[%s0 + $0x2] sm:$0xff]
    %v127 = vld [vmem:[%s0 + $0xa] sm:$0xff]
    %v128 = vld [vmem:[%s0 + $0x12] sm:$0xff]
    %v129 = vld [vmem:[%s0 + $0x1a] sm:$0xff]
    %v130 = vld [vmem:[%s0 + $0x32] sm:$0xff]
    %v131 = vld [vmem:[%s0 + $0x3a] sm:$0xff]
    %v132 = vld [vmem:[%s0 + $0x42] sm:$0xff]
    %v133 = vld [vmem:[%s0 + $0x4a] sm:$0xff]
    %142 = vrot.lane.b32.xlu0 %v126, 8
    %v143 = vpop.permute.xlu0 %142
    %144 = vrot.lane.b32.xlu0 %v127, 8
    %v145 = vpop.permute.xlu0 %144
    %146 = vrot.lane.b32.xlu0 %v128, 8
    %v147 = vpop.permute.xlu0 %146
    %148 = vrot.lane.b32.xlu0 %v129, 8
    %v149 = vpop.permute.xlu0 %148
    %150 = vrot.lane.b32.xlu0 %v130, 8
    %v151 = vpop.permute.xlu0 %150
    %152 = vrot.lane.b32.xlu0 %v131, 8
    %v153 = vpop.permute.xlu0 %152
    %154 = vrot.lane.b32.xlu0 %v132, 8
    %v155 = vpop.permute.xlu0 %154
    %156 = vrot.lane.b32.xlu0 %v133, 8
    %v157 = vpop.permute.xlu0 %156
    %vm166 = vcmask 97344
    %167 = vst.msk [vmem:[#allocation2] sm:$0xff] %vm166, %v143
    %168 = vst.msk [vmem:[#allocation2 + $0x8] sm:$0xff] %vm166, %v145
    %169 = vst.msk [vmem:[#allocation2 + $0x10] sm:$0xff] %vm166, %v147
    %170 = vst.msk [vmem:[#allocation2 + $0x18] sm:$0xff] %vm166, %v149
    %171 = vst.msk [vmem:[#allocation2 + $0x20] sm:$0xff] %vm166, %v151
    %172 = vst.msk [vmem:[#allocation2 + $0x28] sm:$0xff] %vm166, %v153
    %173 = vst.msk [vmem:[#allocation2 + $0x30] sm:$0xff] %vm166, %v155
    %174 = vst.msk [vmem:[#allocation2 + $0x38] sm:$0xff] %vm166, %v157
    %v175 = vld [vmem:[%s0 + $0x3] sm:$0xff]
    %v176 = vld [vmem:[%s0 + $0xb] sm:$0xff]
    %v177 = vld [vmem:[%s0 + $0x13] sm:$0xff]
    %v178 = vld [vmem:[%s0 + $0x1b] sm:$0xff]
    %v179 = vld [vmem:[%s0 + $0x33] sm:$0xff]
    %v180 = vld [vmem:[%s0 + $0x3b] sm:$0xff]
    %v181 = vld [vmem:[%s0 + $0x43] sm:$0xff]
    %v182 = vld [vmem:[%s0 + $0x4b] sm:$0xff]
    %191 = vrot.lane.b32.xlu0 %v175, 12
    %v192 = vpop.permute.xlu0 %191
    %193 = vrot.lane.b32.xlu0 %v176, 12
    %v194 = vpop.permute.xlu0 %193
    %195 = vrot.lane.b32.xlu0 %v177, 12
    %v196 = vpop.permute.xlu0 %195
    %197 = vrot.lane.b32.xlu0 %v178, 12
    %v198 = vpop.permute.xlu0 %197
    %199 = vrot.lane.b32.xlu0 %v179, 12
    %v200 = vpop.permute.xlu0 %199
    %201 = vrot.lane.b32.xlu0 %v180, 12
    %v202 = vpop.permute.xlu0 %201
    %203 = vrot.lane.b32.xlu0 %v181, 12
    %v204 = vpop.permute.xlu0 %203
    %205 = vrot.lane.b32.xlu0 %v182, 12
    %v206 = vpop.permute.xlu0 %205
    %vm215 = vcmask 130144
    %216 = vst.msk [vmem:[#allocation2] sm:$0xff] %vm215, %v192
    %217 = vst.msk [vmem:[#allocation2 + $0x8] sm:$0xff] %vm215, %v194
    %218 = vst.msk [vmem:[#allocation2 + $0x10] sm:$0xff] %vm215, %v196
    %219 = vst.msk [vmem:[#allocation2 + $0x18] sm:$0xff] %vm215, %v198
    %220 = vst.msk [vmem:[#allocation2 + $0x20] sm:$0xff] %vm215, %v200
    %221 = vst.msk [vmem:[#allocation2 + $0x28] sm:$0xff] %vm215, %v202
    %222 = vst.msk [vmem:[#allocation2 + $0x30] sm:$0xff] %vm215, %v204
    %223 = vst.msk [vmem:[#allocation2 + $0x38] sm:$0xff] %vm215, %v206
    %v224 = vld [vmem:[%s0 + $0x4] sm:$0xff]
    %v225 = vld [vmem:[%s0 + $0xc] sm:$0xff]
    %v226 = vld [vmem:[%s0 + $0x14] sm:$0xff]
    %v227 = vld [vmem:[%s0 + $0x1c] sm:$0xff]
    %v228 = vld [vmem:[%s0 + $0x34] sm:$0xff]
    %v229 = vld [vmem:[%s0 + $0x3c] sm:$0xff]
    %v230 = vld [vmem:[%s0 + $0x44] sm:$0xff]
    %v231 = vld [vmem:[%s0 + $0x4c] sm:$0xff]
    %240 = vrot.lane.b32.xlu0 %v224, 16
    %v241 = vpop.permute.xlu0 %240
    %242 = vrot.lane.b32.xlu0 %v225, 16
    %v243 = vpop.permute.xlu0 %242
    %244 = vrot.lane.b32.xlu0 %v226, 16
    %v245 = vpop.permute.xlu0 %244
    %246 = vrot.lane.b32.xlu0 %v227, 16
    %v247 = vpop.permute.xlu0 %246
    %248 = vrot.lane.b32.xlu0 %v228, 16
    %v249 = vpop.permute.xlu0 %248
    %250 = vrot.lane.b32.xlu0 %v229, 16
    %v251 = vpop.permute.xlu0 %250
    %252 = vrot.lane.b32.xlu0 %v230, 16
    %v253 = vpop.permute.xlu0 %252
    %254 = vrot.lane.b32.xlu0 %v231, 16
    %v255 = vpop.permute.xlu0 %254
    %vm264 = vcmask 162944
    %265 = vst.msk [vmem:[#allocation2] sm:$0xff] %vm264, %v241
    %266 = vst.msk [vmem:[#allocation2 + $0x8] sm:$0xff] %vm264, %v243
    %267 = vst.msk [vmem:[#allocation2 + $0x10] sm:$0xff] %vm264, %v245
    %268 = vst.msk [vmem:[#allocation2 + $0x18] sm:$0xff] %vm264, %v247
    %269 = vst.msk [vmem:[#allocation2 + $0x20] sm:$0xff] %vm264, %v249
    %270 = vst.msk [vmem:[#allocation2 + $0x28] sm:$0xff] %vm264, %v251
    %271 = vst.msk [vmem:[#allocation2 + $0x30] sm:$0xff] %vm264, %v253
    %272 = vst.msk [vmem:[#allocation2 + $0x38] sm:$0xff] %vm264, %v255
    %v273 = vld [vmem:[%s0 + $0x5] sm:$0xff]
    %v274 = vld [vmem:[%s0 + $0xd] sm:$0xff]
    %v275 = vld [vmem:[%s0 + $0x15] sm:$0xff]
    %v276 = vld [vmem:[%s0 + $0x1d] sm:$0xff]
    %v277 = vld [vmem:[%s0 + $0x35] sm:$0xff]
    %v278 = vld [vmem:[%s0 + $0x3d] sm:$0xff]
    %v279 = vld [vmem:[%s0 + $0x45] sm:$0xff]
    %v280 = vld [vmem:[%s0 + $0x4d] sm:$0xff]
    %289 = vrot.lane.b32.xlu0 %v273, 20
    %v290 = vpop.permute.xlu0 %289
    %291 = vrot.lane.b32.xlu0 %v274, 20
    %v292 = vpop.permute.xlu0 %291
    %293 = vrot.lane.b32.xlu0 %v275, 20
    %v294 = vpop.permute.xlu0 %293
    %295 = vrot.lane.b32.xlu0 %v276, 20
    %v296 = vpop.permute.xlu0 %295
    %297 = vrot.lane.b32.xlu0 %v277, 20
    %v298 = vpop.permute.xlu0 %297
    %299 = vrot.lane.b32.xlu0 %v278, 20
    %v300 = vpop.permute.xlu0 %299
    %301 = vrot.lane.b32.xlu0 %v279, 20
    %v302 = vpop.permute.xlu0 %301
    %303 = vrot.lane.b32.xlu0 %v280, 20
    %v304 = vpop.permute.xlu0 %303
    %vm313 = vcmask 195744
    %314 = vst.msk [vmem:[#allocation2] sm:$0xff] %vm313, %v290
    %315 = vst.msk [vmem:[#allocation2 + $0x8] sm:$0xff] %vm313, %v292
    %316 = vst.msk [vmem:[#allocation2 + $0x10] sm:$0xff] %vm313, %v294
    %317 = vst.msk [vmem:[#allocation2 + $0x18] sm:$0xff] %vm313, %v296
    %318 = vst.msk [vmem:[#allocation2 + $0x20] sm:$0xff] %vm313, %v298
    %319 = vst.msk [vmem:[#allocation2 + $0x28] sm:$0xff] %vm313, %v300
    %320 = vst.msk [vmem:[#allocation2 + $0x30] sm:$0xff] %vm313, %v302
    %321 = vst.msk [vmem:[#allocation2 + $0x38] sm:$0xff] %vm313, %v304
    %v322 = vld [vmem:[%s0 + $0x6] sm:$0xff]
    %v323 = vld [vmem:[%s0 + $0xe] sm:$0xff]
    %v324 = vld [vmem:[%s0 + $0x16] sm:$0xff]
    %v325 = vld [vmem:[%s0 + $0x1e] sm:$0xff]
    %v326 = vld [vmem:[%s0 + $0x36] sm:$0xff]
    %v327 = vld [vmem:[%s0 + $0x3e] sm:$0xff]
    %v328 = vld [vmem:[%s0 + $0x46] sm:$0xff]
    %v329 = vld [vmem:[%s0 + $0x4e] sm:$0xff]
    %338 = vrot.lane.b32.xlu0 %v322, 24
    %v339 = vpop.permute.xlu0 %338
    %340 = vrot.lane.b32.xlu0 %v323, 24
    %v341 = vpop.permute.xlu0 %340
    %342 = vrot.lane.b32.xlu0 %v324, 24
    %v343 = vpop.permute.xlu0 %342
    %344 = vrot.lane.b32.xlu0 %v325, 24
    %v345 = vpop.permute.xlu0 %344
    %346 = vrot.lane.b32.xlu0 %v326, 24
    %v347 = vpop.permute.xlu0 %346
    %348 = vrot.lane.b32.xlu0 %v327, 24
    %v349 = vpop.permute.xlu0 %348
    %350 = vrot.lane.b32.xlu0 %v328, 24
    %v351 = vpop.permute.xlu0 %350
    %352 = vrot.lane.b32.xlu0 %v329, 24
    %v353 = vpop.permute.xlu0 %352
    %vm362 = vcmask 228544
    %363 = vst.msk [vmem:[#allocation2] sm:$0xff] %vm362, %v339
    %364 = vst.msk [vmem:[#allocation2 + $0x8] sm:$0xff] %vm362, %v341
    %365 = vst.msk [vmem:[#allocation2 + $0x10] sm:$0xff] %vm362, %v343
    %366 = vst.msk [vmem:[#allocation2 + $0x18] sm:$0xff] %vm362, %v345
    %367 = vst.msk [vmem:[#allocation2 + $0x20] sm:$0xff] %vm362, %v347
    %368 = vst.msk [vmem:[#allocation2 + $0x28] sm:$0xff] %vm362, %v349
    %369 = vst.msk [vmem:[#allocation2 + $0x30] sm:$0xff] %vm362, %v351
    %370 = vst.msk [vmem:[#allocation2 + $0x38] sm:$0xff] %vm362, %v353
    %v371 = vld [vmem:[%s0 + $0x7] sm:$0xff]
    %v372 = vld [vmem:[%s0 + $0xf] sm:$0xff]
    %v373 = vld [vmem:[%s0 + $0x17] sm:$0xff]
    %v374 = vld [vmem:[%s0 + $0x1f] sm:$0xff]
    %v375 = vld [vmem:[%s0 + $0x37] sm:$0xff]
    %v376 = vld [vmem:[%s0 + $0x3f] sm:$0xff]
    %v377 = vld [vmem:[%s0 + $0x47] sm:$0xff]
    %v378 = vld [vmem:[%s0 + $0x4f] sm:$0xff]
    %387 = vrot.lane.b32.xlu0 %v371, 28
    %v388 = vpop.permute.xlu0 %387
    %389 = vrot.lane.b32.xlu0 %v372, 28
    %v390 = vpop.permute.xlu0 %389
    %391 = vrot.lane.b32.xlu0 %v373, 28
    %v392 = vpop.permute.xlu0 %391
    %393 = vrot.lane.b32.xlu0 %v374, 28
    %v394 = vpop.permute.xlu0 %393
    %395 = vrot.lane.b32.xlu0 %v375, 28
    %v396 = vpop.permute.xlu0 %395
    %397 = vrot.lane.b32.xlu0 %v376, 28
    %v398 = vpop.permute.xlu0 %397
    %399 = vrot.lane.b32.xlu0 %v377, 28
    %v400 = vpop.permute.xlu0 %399
    %401 = vrot.lane.b32.xlu0 %v378, 28
    %v402 = vpop.permute.xlu0 %401
    %vm411 = vcmask 261344
    %412 = vst.msk [vmem:[#allocation2] sm:$0xff] %vm411, %v388
    %413 = vst.msk [vmem:[#allocation2 + $0x8] sm:$0xff] %vm411, %v390
    %414 = vst.msk [vmem:[#allocation2 + $0x10] sm:$0xff] %vm411, %v392
    %415 = vst.msk [vmem:[#allocation2 + $0x18] sm:$0xff] %vm411, %v394
    %416 = vst.msk [vmem:[#allocation2 + $0x20] sm:$0xff] %vm411, %v396
    %417 = vst.msk [vmem:[#allocation2 + $0x28] sm:$0xff] %vm411, %v398
    %418 = vst.msk [vmem:[#allocation2 + $0x30] sm:$0xff] %vm411, %v400
    %419 = vst.msk [vmem:[#allocation2 + $0x38] sm:$0xff] %vm411, %v402
    %v420 = vld [vmem:[%s0 + $0x8] sm:$0xff]
    %v421 = vld [vmem:[%s0 + $0x10] sm:$0xff]
    %v422 = vld [vmem:[%s0 + $0x18] sm:$0xff]
    %v423 = vld [vmem:[%s0 + $0x20] sm:$0xff]
    %v424 = vld [vmem:[%s0 + $0x38] sm:$0xff]
    %v425 = vld [vmem:[%s0 + $0x40] sm:$0xff]
    %v426 = vld [vmem:[%s0 + $0x48] sm:$0xff]
    %v427 = vld [vmem:[%s0 + $0x50] sm:$0xff]
    %436 = vrot.lane.b32.xlu0 %v420, 32
    %v437 = vpop.permute.xlu0 %436
    %438 = vrot.lane.b32.xlu0 %v421, 32
    %v439 = vpop.permute.xlu0 %438
    %440 = vrot.lane.b32.xlu0 %v422, 32
    %v441 = vpop.permute.xlu0 %440
    %442 = vrot.lane.b32.xlu0 %v423, 32
    %v443 = vpop.permute.xlu0 %442
    %444 = vrot.lane.b32.xlu0 %v424, 32
    %v445 = vpop.permute.xlu0 %444
    %446 = vrot.lane.b32.xlu0 %v425, 32
    %v447 = vpop.permute.xlu0 %446
    %448 = vrot.lane.b32.xlu0 %v426, 32
    %v449 = vpop.permute.xlu0 %448
    %450 = vrot.lane.b32.xlu0 %v427, 32
    %v451 = vpop.permute.xlu0 %450
    %vm460 = vcmask 294144
    %461 = vst.msk [vmem:[#allocation2] sm:$0xff] %vm460, %v437
    %462 = vst.msk [vmem:[#allocation2 + $0x8] sm:$0xff] %vm460, %v439
    %463 = vst.msk [vmem:[#allocation2 + $0x10] sm:$0xff] %vm460, %v441
    %464 = vst.msk [vmem:[#allocation2 + $0x18] sm:$0xff] %vm460, %v443
    %465 = vst.msk [vmem:[#allocation2 + $0x20] sm:$0xff] %vm460, %v445
    %466 = vst.msk [vmem:[#allocation2 + $0x28] sm:$0xff] %vm460, %v447
    %467 = vst.msk [vmem:[#allocation2 + $0x30] sm:$0xff] %vm460, %v449
    %468 = vst.msk [vmem:[#allocation2 + $0x38] sm:$0xff] %vm460, %v451
    %v469 = vld [vmem:[%s0 + $0x9] sm:$0xff]
    %v470 = vld [vmem:[%s0 + $0x11] sm:$0xff]
    %v471 = vld [vmem:[%s0 + $0x19] sm:$0xff]
    %v472 = vld [vmem:[%s0 + $0x21] sm:$0xff]
    %v473 = vld [vmem:[%s0 + $0x39] sm:$0xff]
    %v474 = vld [vmem:[%s0 + $0x41] sm:$0xff]
    %v475 = vld [vmem:[%s0 + $0x49] sm:$0xff]
    %v476 = vld [vmem:[%s0 + $0x51] sm:$0xff]
    %485 = vrot.lane.b32.xlu0 %v469, 36
    %v486 = vpop.permute.xlu0 %485
    %487 = vrot.lane.b32.xlu0 %v470, 36
    %v488 = vpop.permute.xlu0 %487
    %489 = vrot.lane.b32.xlu0 %v471, 36
    %v490 = vpop.permute.xlu0 %489
    %491 = vrot.lane.b32.xlu0 %v472, 36
    %v492 = vpop.permute.xlu0 %491
    %493 = vrot.lane.b32.xlu0 %v473, 36
    %v494 = vpop.permute.xlu0 %493
    %495 = vrot.lane.b32.xlu0 %v474, 36
    %v496 = vpop.permute.xlu0 %495
    %497 = vrot.lane.b32.xlu0 %v475, 36
    %v498 = vpop.permute.xlu0 %497
    %499 = vrot.lane.b32.xlu0 %v476, 36
    %v500 = vpop.permute.xlu0 %499
    %vm509 = vcmask 326944
    %510 = vst.msk [vmem:[#allocation2] sm:$0xff] %vm509, %v486
    %511 = vst.msk [vmem:[#allocation2 + $0x8] sm:$0xff] %vm509, %v488
    %512 = vst.msk [vmem:[#allocation2 + $0x10] sm:$0xff] %vm509, %v490
    %513 = vst.msk [vmem:[#allocation2 + $0x18] sm:$0xff] %vm509, %v492
    %514 = vst.msk [vmem:[#allocation2 + $0x20] sm:$0xff] %vm509, %v494
    %515 = vst.msk [vmem:[#allocation2 + $0x28] sm:$0xff] %vm509, %v496
    %516 = vst.msk [vmem:[#allocation2 + $0x30] sm:$0xff] %vm509, %v498
    %517 = vst.msk [vmem:[#allocation2 + $0x38] sm:$0xff] %vm509, %v500
    %v518 = vld [vmem:[%s0 + $0xa] sm:$0xff]
    %v519 = vld [vmem:[%s0 + $0x12] sm:$0xff]
    %v520 = vld [vmem:[%s0 + $0x1a] sm:$0xff]
    %v521 = vld [vmem:[%s0 + $0x22] sm:$0xff]
    %v522 = vld [vmem:[%s0 + $0x3a] sm:$0xff]
    %v523 = vld [vmem:[%s0 + $0x42] sm:$0xff]
    %v524 = vld [vmem:[%s0 + $0x4a] sm:$0xff]
    %v525 = vld [vmem:[%s0 + $0x52] sm:$0xff]
    %534 = vrot.lane.b32.xlu0 %v518, 40
    %v535 = vpop.permute.xlu0 %534
    %536 = vrot.lane.b32.xlu0 %v519, 40
    %v537 = vpop.permute.xlu0 %536
    %538 = vrot.lane.b32.xlu0 %v520, 40
    %v539 = vpop.permute.xlu0 %538
    %540 = vrot.lane.b32.xlu0 %v521, 40
    %v541 = vpop.permute.xlu0 %540
    %542 = vrot.lane.b32.xlu0 %v522, 40
    %v543 = vpop.permute.xlu0 %542
    %544 = vrot.lane.b32.xlu0 %v523, 40
    %v545 = vpop.permute.xlu0 %544
    %546 = vrot.lane.b32.xlu0 %v524, 40
    %v547 = vpop.permute.xlu0 %546
    %548 = vrot.lane.b32.xlu0 %v525, 40
    %v549 = vpop.permute.xlu0 %548
    %vm558 = vcmask 359744
    %559 = vst.msk [vmem:[#allocation2] sm:$0xff] %vm558, %v535
    %560 = vst.msk [vmem:[#allocation2 + $0x8] sm:$0xff] %vm558, %v537
    %561 = vst.msk [vmem:[#allocation2 + $0x10] sm:$0xff] %vm558, %v539
    %562 = vst.msk [vmem:[#allocation2 + $0x18] sm:$0xff] %vm558, %v541
    %563 = vst.msk [vmem:[#allocation2 + $0x20] sm:$0xff] %vm558, %v543
    %564 = vst.msk [vmem:[#allocation2 + $0x28] sm:$0xff] %vm558, %v545
    %565 = vst.msk [vmem:[#allocation2 + $0x30] sm:$0xff] %vm558, %v547
    %566 = vst.msk [vmem:[#allocation2 + $0x38] sm:$0xff] %vm558, %v549
    %v567 = vld [vmem:[#allocation2] sm:$0xff]
    %v568 = vld [vmem:[#allocation2 + $0x8] sm:$0xff]
    %v569 = vld [vmem:[#allocation2 + $0x10] sm:$0xff]
    %v570 = vld [vmem:[#allocation2 + $0x18] sm:$0xff]
    %v571 = vld [vmem:[#allocation2 + $0x20] sm:$0xff]
    %v572 = vld [vmem:[#allocation2 + $0x28] sm:$0xff]
    %v573 = vld [vmem:[#allocation2 + $0x30] sm:$0xff]
    %v574 = vld [vmem:[#allocation2 + $0x38] sm:$0xff]
    %v575 = vld [vmem:[%s1] sm:$0xff]
    %v576 = vld [vmem:[%s1 + $0x8] sm:$0xff]
    %v577 = vld [vmem:[%s1 + $0x10] sm:$0xff]
    %v578 = vld [vmem:[%s1 + $0x18] sm:$0xff]
    %v579 = vld [vmem:[%s1 + $0x20] sm:$0xff]
    %v580 = vld [vmem:[%s1 + $0x28] sm:$0xf]
    %vm581 = vcmask 359424
    %v583 = vsel %vm581, %v567, 0
    %v586 = vsel %vm581, %v568, 0
    %v589 = vsel %vm581, %v569, 0
    %v592 = vsel %vm581, %v570, 0
    %v595 = vsel %vm581, %v571, 0
    %v598 = vsel %vm581, %v572, 0
    %v601 = vsel %vm581, %v573, 0
    %v604 = vsel %vm581, %v574, 0
    %vm606 = vcmask 1043456
    %v608 = vsel %vm606, %v580, 0
    %610 = vmatprep.subr.mxu0 0.0
    %611 = vmatpush1.msra.mxu0 %v575
    %612 = vmatprep.subr.mxu0 0.0
    %613 = vmatpush1.msra.mxu0 %v576
    %614 = vmatprep.subr.mxu0 0.0
    %615 = vmatpush1.msra.mxu0 %v577
    %616 = vmatprep.subr.mxu0 0.0
    %617 = vmatpush1.msra.mxu0 %v578
    %618 = vmatprep.subr.mxu0 0.0
    %619 = vmatpush1.msra.mxu0 %v579
    %620 = vmatprep.subr.mxu0 0.0
    %621 = vmatpush1.msra.mxu0 %v608
    %622 = vmatprep.subr.mxu0 0.0
    %623 = vmatpush1.msra.mxu0 0.0
    %624 = vmatprep.subr.mxu0 0.0
    %625 = vmatpush1.msra.mxu0 0.0
    %626 = vmatprep.subr.mxu0 0.0
    %627 = vmatpush1.msra.mxu0 0.0
    %628 = vmatprep.subr.mxu0 0.0
    %629 = vmatpush1.msra.mxu0 0.0
    %630 = vmatprep.subr.mxu0 0.0
    %631 = vmatpush1.msra.mxu0 0.0
    %632 = vmatprep.subr.mxu0 0.0
    %633 = vmatpush1.msra.mxu0 0.0
    %634 = vmatprep.subr.mxu0 0.0
    %635 = vmatpush1.msra.mxu0 0.0
    %636 = vmatprep.subr.mxu0 0.0
    %637 = vmatpush1.msra.mxu0 0.0
    %638 = vmatprep.subr.mxu0 0.0
    %639 = vmatpush1.msra.mxu0 0.0
    %640 = vmatprep.subr.mxu0 0.0
    %641 = vmatpush1.msra.mxu0 0.0
    %642 = vmatprep.subr.mxu0 0.0
    %643 = vmatpush1.msra.mxu0 0.0
    %644 = vmatprep.subr.mxu0 0.0
    %645 = vmatpush1.msra.mxu0 0.0
    %646 = vmatprep.subr.mxu0 0.0
    %647 = vmatpush1.msra.mxu0 0.0
    %648 = vmatprep.subr.mxu0 0.0
    %649 = vmatpush1.msra.mxu0 0.0
    %650 = vmatprep.subr.mxu0 0.0
    %651 = vmatpush1.msra.mxu0 0.0
    %652 = vmatprep.subr.mxu0 0.0
    %653 = vmatpush1.msra.mxu0 0.0
    %654 = vmatprep.subr.mxu0 0.0
    %655 = vmatpush1.msra.mxu0 0.0
    %656 = vmatprep.subr.mxu0 0.0
    %657 = vmatpush1.msra.mxu0 0.0
    %658 = vmatprep.subr.mxu0 0.0
    %659 = vmatpush1.msra.mxu0 0.0
    %660 = vmatprep.subr.mxu0 0.0
    %661 = vmatpush1.msra.mxu0 0.0
    %662 = vmatprep.subr.mxu0 0.0
    %663 = vmatpush1.msra.mxu0 0.0
    %664 = vmatprep.subr.mxu0 0.0
    %665 = vmatpush1.msra.mxu0 0.0
    %666 = vmatprep.subr.mxu0 0.0
    %667 = vmatpush1.msra.mxu0 0.0
    %668 = vmatprep.subr.mxu0 0.0
    %669 = vmatpush1.msra.mxu0 0.0
    %670 = vmatprep.subr.mxu0 0.0
    %671 = vmatpush1.msra.mxu0 0.0
    %672 = vmatprep.subr.mxu0 0.0
    %673 = vmatpush1.msra.mxu0 0.0
    %674 = vmatprep.mubr.f32.mxu0 0.0
    %675 = vmatmul.mubr.f32.gmra.mrb[0].mxu0 %v583
    %v676 = vpop.f32.mrb[0].mxu0
    %v677 = vadd.f32 0.0, %v676
    %v678 = vpop.f32.mrb[0].mxu0
    %679 = vmatprep.mubr.f32.mxu0 0.0
    %680 = vmatmul.mubr.f32.gmra.mrb[0].mxu0 %v586
    %v681 = vpop.f32.mrb[0].mxu0
    %v682 = vadd.f32 0.0, %v681
    %v683 = vpop.f32.mrb[0].mxu0
    %684 = vmatprep.mubr.f32.mxu0 0.0
    %685 = vmatmul.mubr.f32.gmra.mrb[0].mxu0 %v589
    %v686 = vpop.f32.mrb[0].mxu0
    %v687 = vadd.f32 0.0, %v686
    %v688 = vpop.f32.mrb[0].mxu0
    %689 = vmatprep.mubr.f32.mxu0 0.0
    %690 = vmatmul.mubr.f32.gmra.mrb[0].mxu0 %v592
    %v691 = vpop.f32.mrb[0].mxu0
    %v692 = vadd.f32 0.0, %v691
    %v693 = vpop.f32.mrb[0].mxu0
    %694 = vmatprep.mubr.f32.mxu0 0.0
    %695 = vmatmul.mubr.f32.gmra.mrb[0].mxu0 %v595
    %v696 = vpop.f32.mrb[0].mxu0
    %v697 = vadd.f32 0.0, %v696
    %v698 = vpop.f32.mrb[0].mxu0
    %699 = vmatprep.mubr.f32.mxu0 0.0
    %700 = vmatmul.mubr.f32.gmra.mrb[0].mxu0 %v598
    %v701 = vpop.f32.mrb[0].mxu0
    %v702 = vadd.f32 0.0, %v701
    %v703 = vpop.f32.mrb[0].mxu0
    %704 = vmatprep.mubr.f32.mxu0 0.0
    %705 = vmatmul.mubr.f32.gmra.mrb[0].mxu0 %v601
    %v706 = vpop.f32.mrb[0].mxu0
    %v707 = vadd.f32 0.0, %v706
    %v708 = vpop.f32.mrb[0].mxu0
    %709 = vmatprep.mubr.f32.mxu0 0.0
    %710 = vmatmul.mubr.f32.gmra.mrb[0].mxu0 %v604
    %v711 = vpop.f32.mrb[0].mxu0
    %v712 = vadd.f32 0.0, %v711
    %v713 = vpop.f32.mrb[0].mxu0
    %714 = vdwg.mxu0
    %vm715 = vcmask 130048
    %v716 = vsel %vm715, %v677, 0.0
    %v717 = vsel %vm715, %v682, 0.0
    %v718 = vadd.f32 %v716, %v717
    %v719 = vsel %vm715, %v687, 0.0
    %v720 = vadd.f32 %v718, %v719
    %v721 = vsel %vm715, %v692, 0.0
    %v722 = vadd.f32 %v720, %v721
    %v723 = vsel %vm715, %v697, 0.0
    %v724 = vadd.f32 %v722, %v723
    %v725 = vsel %vm715, %v702, 0.0
    %v726 = vadd.f32 %v724, %v725
    %v727 = vsel %vm715, %v707, 0.0
    %v728 = vadd.f32 %v726, %v727
    %v729 = vsel %vm715, %v712, 0.0
    %v730 = vadd.f32 %v728, %v729
    %v731 = vrot.slane %v730, 4
    %v732 = vadd.f32 %v730, %v731
    %v733 = vrot.slane %v732, 2
    %v734 = vadd.f32 %v732, %v733
    %v735 = vrot.slane %v734, 1
    %v736 = vadd.f32 %v734, %v735
    %v737 = vmul.f32 %v736, 0.015625
    %v738 = vmul.f32 %v677, %v677
    %v739 = vmul.f32 %v682, %v682
    %v740 = vmul.f32 %v687, %v687
    %v741 = vmul.f32 %v692, %v692
    %v742 = vmul.f32 %v697, %v697
    %v743 = vmul.f32 %v702, %v702
    %v744 = vmul.f32 %v707, %v707
    %v745 = vmul.f32 %v712, %v712
    %v746 = vsel %vm715, %v738, 0.0
    %v747 = vsel %vm715, %v739, 0.0
    %v748 = vadd.f32 %v746, %v747
    %v749 = vsel %vm715, %v740, 0.0
    %v750 = vadd.f32 %v748, %v749
    %v751 = vsel %vm715, %v741, 0.0
    %v752 = vadd.f32 %v750, %v751
    %v753 = vsel %vm715, %v742, 0.0
    %v754 = vadd.f32 %v752, %v753
    %v755 = vsel %vm715, %v743, 0.0
    %v756 = vadd.f32 %v754, %v755
    %v757 = vsel %vm715, %v744, 0.0
    %v758 = vadd.f32 %v756, %v757
    %v759 = vsel %vm715, %v745, 0.0
    %v760 = vadd.f32 %v758, %v759
    %v761 = vrot.slane %v760, 4
    %v762 = vadd.f32 %v760, %v761
    %v763 = vrot.slane %v762, 2
    %v764 = vadd.f32 %v762, %v763
    %v765 = vrot.slane %v764, 1
    %v766 = vadd.f32 %v764, %v765
    %v767 = vmul.f32 %v766, 0.015625
    %v768 = vmul.f32 %v737, %v737
    %v769 = vsub.f32 %v767, %v768
    %v770 = vsub.f32 %v677, %v737
    %v771 = vsub.f32 %v682, %v737
    %v772 = vsub.f32 %v687, %v737
    %v773 = vsub.f32 %v692, %v737
    %v774 = vsub.f32 %v697, %v737
    %v775 = vsub.f32 %v702, %v737
    %v776 = vsub.f32 %v707, %v737
    %v777 = vsub.f32 %v712, %v737
    %v778 = vld [vmem:[%s2] sm:$0x1]
    %v779 = vadd.f32 %v769, 1e-05
    %v780 = vrsqrt.pop %v779
    %v781 = vmul.f32 %v778, %v780
    %v783 = vlaneseq
    %v784 = vshrl.u32 %v783, 7
    %v785 = vsub.s32 0, %v784
    %v786 = vrot.slane %v781, %v785
    %v788 = vmul.f32 %v770, %v786
    %v789 = vmul.f32 %v771, %v786
    %v790 = vmul.f32 %v772, %v786
    %v791 = vmul.f32 %v773, %v786
    %v792 = vmul.f32 %v774, %v786
    %v793 = vmul.f32 %v775, %v786
    %v794 = vmul.f32 %v776, %v786
    %v795 = vmul.f32 %v777, %v786
    %v796 = vld [vmem:[%s3] sm:$0x1]
    %v798 = vlaneseq
    %v799 = vshrl.u32 %v798, 7
    %v800 = vsub.s32 0, %v799
    %v801 = vrot.slane %v796, %v800
    %v803 = vadd.f32 %v788, %v801
    %v804 = vadd.f32 %v789, %v801
    %v805 = vadd.f32 %v790, %v801
    %v806 = vadd.f32 %v791, %v801
    %v807 = vadd.f32 %v792, %v801
    %v808 = vadd.f32 %v793, %v801
    %v809 = vadd.f32 %v794, %v801
    %v810 = vadd.f32 %v795, %v801
    %vm811 = vcmp.gt.f32.partialorder %v803, 0.0
    %vm812 = vcmp.gt.f32.partialorder %v804, 0.0
    %vm813 = vcmp.gt.f32.partialorder %v805, 0.0
    %vm814 = vcmp.gt.f32.partialorder %v806, 0.0
    %vm815 = vcmp.gt.f32.partialorder %v807, 0.0
    %vm816 = vcmp.gt.f32.partialorder %v808, 0.0
    %vm817 = vcmp.gt.f32.partialorder %v809, 0.0
    %vm818 = vcmp.gt.f32.partialorder %v810, 0.0
    %v819 = vmin.f32 %v803, 0.0
    %v820 = vmin.f32 %v804, 0.0
    %v821 = vmin.f32 %v805, 0.0
    %v822 = vmin.f32 %v806, 0.0
    %v823 = vmin.f32 %v807, 0.0
    %v824 = vmin.f32 %v808, 0.0
    %v825 = vmin.f32 %v809, 0.0
    %v826 = vmin.f32 %v810, 0.0
    %v827 = vmul.f32 %v819, 1.442695
    %v828 = vpow.pop %v827
    %v829 = vmul.f32 %v820, 1.442695
    %v830 = vpow.pop %v829
    %v831 = vmul.f32 %v821, 1.442695
    %v832 = vpow.pop %v831
    %v833 = vmul.f32 %v822, 1.442695
    %v834 = vpow.pop %v833
    %v835 = vmul.f32 %v823, 1.442695
    %v836 = vpow.pop %v835
    %v837 = vmul.f32 %v824, 1.442695
    %v838 = vpow.pop %v837
    %v839 = vmul.f32 %v825, 1.442695
    %v840 = vpow.pop %v839
    %v841 = vmul.f32 %v826, 1.442695
    %v842 = vpow.pop %v841
    %v843 = vsub.f32 %v828, 1.0
    %v844 = vsub.f32 %v830, 1.0
    %v845 = vsub.f32 %v832, 1.0
    %v846 = vsub.f32 %v834, 1.0
    %v847 = vsub.f32 %v836, 1.0
    %v848 = vsub.f32 %v838, 1.0
    %v849 = vsub.f32 %v840, 1.0
    %v850 = vsub.f32 %v842, 1.0
    %v851 = vmul.f32 %v843, 1.6732632
    %v852 = vmul.f32 %v844, 1.6732632
    %v853 = vmul.f32 %v845, 1.6732632
    %v854 = vmul.f32 %v846, 1.6732632
    %v855 = vmul.f32 %v847, 1.6732632
    %v856 = vmul.f32 %v848, 1.6732632
    %v857 = vmul.f32 %v849, 1.6732632
    %v858 = vmul.f32 %v850, 1.6732632
    %v859 = vsel %vm811, %v803, %v851
    %v860 = vsel %vm812, %v804, %v852
    %v861 = vsel %vm813, %v805, %v853
    %v862 = vsel %vm814, %v806, %v854
    %v863 = vsel %vm815, %v807, %v855
    %v864 = vsel %vm816, %v808, %v856
    %v865 = vsel %vm817, %v809, %v857
    %v866 = vsel %vm818, %v810, %v858
    %v867 = vmul.f32 %v859, 1.050701
    %v868 = vmul.f32 %v860, 1.050701
    %v869 = vmul.f32 %v861, 1.050701
    %v870 = vmul.f32 %v862, 1.050701
    %v871 = vmul.f32 %v863, 1.050701
    %v872 = vmul.f32 %v864, 1.050701
    %v873 = vmul.f32 %v865, 1.050701
    %v874 = vmul.f32 %v866, 1.050701
    %v875 = vld [vmem:[%s10] sm:$0xff]
    %v876 = vld [vmem:[%s10 + $0x8] sm:$0xff]
    %v877 = vld [vmem:[%s10 + $0x10] sm:$0xff]
    %v878 = vld [vmem:[%s10 + $0x18] sm:$0xff]
    %vm879 = vcmask 523264
    %v881 = vsel %vm879, %v875, 0
    %v884 = vsel %vm879, %v876, 0
    %v887 = vsel %vm879, %v877, 0
    %v890 = vsel %vm879, %v878, 0
    %892 = vmatprep.subr.mxu0 0.0
    %893 = vmatpush1.msra.mxu0 %v867
    %894 = vmatprep.subr.mxu0 0.0
    %895 = vmatpush1.msra.mxu0 %v868
    %896 = vmatprep.subr.mxu0 0.0
    %897 = vmatpush1.msra.mxu0 %v869
    %898 = vmatprep.subr.mxu0 0.0
    %899 = vmatpush1.msra.mxu0 %v870
    %900 = vmatprep.subr.mxu0 0.0
    %901 = vmatpush1.msra.mxu0 %v871
    %902 = vmatprep.subr.mxu0 0.0
    %903 = vmatpush1.msra.mxu0 %v872
    %904 = vmatprep.subr.mxu0 0.0
    %905 = vmatpush1.msra.mxu0 %v873
    %906 = vmatprep.subr.mxu0 0.0
    %907 = vmatpush1.msra.mxu0 %v874
    %908 = vmatprep.subr.mxu0 0.0
    %909 = vmatpush1.msra.mxu0 0.0
    %910 = vmatprep.subr.mxu0 0.0
    %911 = vmatpush1.msra.mxu0 0.0
    %912 = vmatprep.subr.mxu0 0.0
    %913 = vmatpush1.msra.mxu0 0.0
    %914 = vmatprep.subr.mxu0 0.0
    %915 = vmatpush1.msra.mxu0 0.0
    %916 = vmatprep.subr.mxu0 0.0
    %917 = vmatpush1.msra.mxu0 0.0
    %918 = vmatprep.subr.mxu0 0.0
    %919 = vmatpush1.msra.mxu0 0.0
    %920 = vmatprep.subr.mxu0 0.0
    %921 = vmatpush1.msra.mxu0 0.0
    %922 = vmatprep.subr.mxu0 0.0
    %923 = vmatpush1.msra.mxu0 0.0
    %924 = vmatprep.subr.mxu0 0.0
    %925 = vmatpush1.msra.mxu0 0.0
    %926 = vmatprep.subr.mxu0 0.0
    %927 = vmatpush1.msra.mxu0 0.0
    %928 = vmatprep.subr.mxu0 0.0
    %929 = vmatpush1.msra.mxu0 0.0
    %930 = vmatprep.subr.mxu0 0.0
    %931 = vmatpush1.msra.mxu0 0.0
    %932 = vmatprep.subr.mxu0 0.0
    %933 = vmatpush1.msra.mxu0 0.0
    %934 = vmatprep.subr.mxu0 0.0
    %935 = vmatpush1.msra.mxu0 0.0
    %936 = vmatprep.subr.mxu0 0.0
    %937 = vmatpush1.msra.mxu0 0.0
    %938 = vmatprep.subr.mxu0 0.0
    %939 = vmatpush1.msra.mxu0 0.0
    %940 = vmatprep.subr.mxu0 0.0
    %941 = vmatpush1.msra.mxu0 0.0
    %942 = vmatprep.subr.mxu0 0.0
    %943 = vmatpush1.msra.mxu0 0.0
    %944 = vmatprep.subr.mxu0 0.0
    %945 = vmatpush1.msra.mxu0 0.0
    %946 = vmatprep.subr.mxu0 0.0
    %947 = vmatpush1.msra.mxu0 0.0
    %948 = vmatprep.subr.mxu0 0.0
    %949 = vmatpush1.msra.mxu0 0.0
    %950 = vmatprep.subr.mxu0 0.0
    %951 = vmatpush1.msra.mxu0 0.0
    %952 = vmatprep.subr.mxu0 0.0
    %953 = vmatpush1.msra.mxu0 0.0
    %954 = vmatprep.subr.mxu0 0.0
    %955 = vmatpush1.msra.mxu0 0.0
    %956 = vmatprep.mubr.f32.mxu0 0.0
    %957 = vmatmul.mubr.f32.gmra.mrb[0].mxu0 %v881
    %v958 = vpop.f32.mrb[0].mxu0
    %v959 = vadd.f32 0.0, %v958
    %v960 = vpop.f32.mrb[0].mxu0
    %961 = vmatprep.mubr.f32.mxu0 0.0
    %962 = vmatmul.mubr.f32.gmra.mrb[0].mxu0 %v884
    %v963 = vpop.f32.mrb[0].mxu0
    %v964 = vadd.f32 0.0, %v963
    %v965 = vpop.f32.mrb[0].mxu0
    %966 = vmatprep.mubr.f32.mxu0 0.0
    %967 = vmatmul.mubr.f32.gmra.mrb[0].mxu0 %v887
    %v968 = vpop.f32.mrb[0].mxu0
    %v969 = vadd.f32 0.0, %v968
    %v970 = vpop.f32.mrb[0].mxu0
    %971 = vmatprep.mubr.f32.mxu0 0.0
    %972 = vmatmul.mubr.f32.gmra.mrb[0].mxu0 %v890
    %v973 = vpop.f32.mrb[0].mxu0
    %v974 = vadd.f32 0.0, %v973
    %v975 = vpop.f32.mrb[0].mxu0
    %976 = vdwg.mxu0
    %vm977 = vcmask 126976
    %978 = vst.msk [vmem:[#allocation3] sm:$0x1f] %vm977, 0.0
    %979 = vst.msk [vmem:[#allocation3 + $0x20] sm:$0x1f] %vm977, 0.0
    %980 = vst.msk [vmem:[#allocation3 + $0x15] sm:$0x1f] %vm977, 0.0
    %981 = vst.msk [vmem:[#allocation3 + $0x35] sm:$0x1f] %vm977, 0.0
    %982 = vst.msk [vmem:[#allocation3 + $0x5] sm:$0xff] %vm715, %v959
    %983 = vst.msk [vmem:[#allocation3 + $0xd] sm:$0xff] %vm715, %v964
    %984 = vst.msk [vmem:[#allocation3 + $0x25] sm:$0xff] %vm715, %v969
    %985 = vst.msk [vmem:[#allocation3 + $0x2d] sm:$0xff] %vm715, %v974
    %v986 = vld [vmem:[#allocation3] sm:$0xff]
    %v987 = vld [vmem:[#allocation3 + $0x8] sm:$0xff]
    %v988 = vld [vmem:[#allocation3 + $0x20] sm:$0xff]
    %v989 = vld [vmem:[#allocation3 + $0x28] sm:$0xff]
    %990 = vst.msk [vmem:[#allocation4] sm:$0xff] %vm715, %v986
    %991 = vst.msk [vmem:[#allocation4 + $0x10] sm:$0xff] %vm715, %v987
    %992 = vst.msk [vmem:[#allocation4 + $0x20] sm:$0xff] %vm715, %v988
    %993 = vst.msk [vmem:[#allocation4 + $0x30] sm:$0xff] %vm715, %v989
    %v994 = vld [vmem:[#allocation3 + $0x1] sm:$0xff]
    %v995 = vld [vmem:[#allocation3 + $0x9] sm:$0xff]
    %v996 = vld [vmem:[#allocation3 + $0x21] sm:$0xff]
    %v997 = vld [vmem:[#allocation3 + $0x29] sm:$0xff]
    %1002 = vrot.lane.b32.xlu0 %v994, 16
    %v1003 = vpop.permute.xlu0 %1002
    %1004 = vrot.lane.b32.xlu0 %v995, 16
    %v1005 = vpop.permute.xlu0 %1004
    %1006 = vrot.lane.b32.xlu0 %v996, 16
    %v1007 = vpop.permute.xlu0 %1006
    %1008 = vrot.lane.b32.xlu0 %v997, 16
    %v1009 = vpop.permute.xlu0 %1008
    %vm1014 = vcmask 261248
    %1015 = vst.msk [vmem:[#allocation4] sm:$0xff] %vm1014, %v1003
    %1016 = vst.msk [vmem:[#allocation4 + $0x10] sm:$0xff] %vm1014, %v1005
    %1017 = vst.msk [vmem:[#allocation4 + $0x20] sm:$0xff] %vm1014, %v1007
    %1018 = vst.msk [vmem:[#allocation4 + $0x30] sm:$0xff] %vm1014, %v1009
    %v1019 = vld [vmem:[#allocation3 + $0x2] sm:$0xff]
    %v1020 = vld [vmem:[#allocation3 + $0xa] sm:$0xff]
    %v1021 = vld [vmem:[#allocation3 + $0x22] sm:$0xff]
    %v1022 = vld [vmem:[#allocation3 + $0x2a] sm:$0xff]
    %1027 = vrot.lane.b32.xlu0 %v1019, 32
    %v1028 = vpop.permute.xlu0 %1027
    %1029 = vrot.lane.b32.xlu0 %v1020, 32
    %v1030 = vpop.permute.xlu0 %1029
    %1031 = vrot.lane.b32.xlu0 %v1021, 32
    %v1032 = vpop.permute.xlu0 %1031
    %1033 = vrot.lane.b32.xlu0 %v1022, 32
    %v1034 = vpop.permute.xlu0 %1033
    %vm1039 = vcmask 392448
    %1040 = vst.msk [vmem:[#allocation4] sm:$0xff] %vm1039, %v1028
    %1041 = vst.msk [vmem:[#allocation4 + $0x10] sm:$0xff] %vm1039, %v1030
    %1042 = vst.msk [vmem:[#allocation4 + $0x20] sm:$0xff] %vm1039, %v1032
    %1043 = vst.msk [vmem:[#allocation4 + $0x30] sm:$0xff] %vm1039, %v1034
    %v1044 = vld [vmem:[#allocation3 + $0x3] sm:$0xff]
    %v1045 = vld [vmem:[#allocation3 + $0xb] sm:$0xff]
    %v1046 = vld [vmem:[#allocation3 + $0x23] sm:$0xff]
    %v1047 = vld [vmem:[#allocation3 + $0x2b] sm:$0xff]
    %1052 = vrot.lane.b32.xlu0 %v1044, 48
    %v1053 = vpop.permute.xlu0 %1052
    %1054 = vrot.lane.b32.xlu0 %v1045, 48
    %v1055 = vpop.permute.xlu0 %1054
    %1056 = vrot.lane.b32.xlu0 %v1046, 48
    %v1057 = vpop.permute.xlu0 %1056
    %1058 = vrot.lane.b32.xlu0 %v1047, 48
    %v1059 = vpop.permute.xlu0 %1058
    %vm1064 = vcmask 523648
    %1065 = vst.msk [vmem:[#allocation4] sm:$0xff] %vm1064, %v1053
    %1066 = vst.msk [vmem:[#allocation4 + $0x10] sm:$0xff] %vm1064, %v1055
    %1067 = vst.msk [vmem:[#allocation4 + $0x20] sm:$0xff] %vm1064, %v1057
    %1068 = vst.msk [vmem:[#allocation4 + $0x30] sm:$0xff] %vm1064, %v1059
    %v1069 = vld [vmem:[#allocation3 + $0x4] sm:$0xff]
    %v1070 = vld [vmem:[#allocation3 + $0xc] sm:$0xff]
    %v1071 = vld [vmem:[#allocation3 + $0x24] sm:$0xff]
    %v1072 = vld [vmem:[#allocation3 + $0x2c] sm:$0xff]
    %1077 = vrot.lane.b32.xlu0 %v1069, 64
    %v1078 = vpop.permute.xlu0 %1077
    %1079 = vrot.lane.b32.xlu0 %v1070, 64
    %v1080 = vpop.permute.xlu0 %1079
    %1081 = vrot.lane.b32.xlu0 %v1071, 64
    %v1082 = vpop.permute.xlu0 %1081
    %1083 = vrot.lane.b32.xlu0 %v1072, 64
    %v1084 = vpop.permute.xlu0 %1083
    %vm1089 = vcmask 654848
    %1090 = vst.msk [vmem:[#allocation4] sm:$0xff] %vm1089, %v1078
    %1091 = vst.msk [vmem:[#allocation4 + $0x10] sm:$0xff] %vm1089, %v1080
    %1092 = vst.msk [vmem:[#allocation4 + $0x20] sm:$0xff] %vm1089, %v1082
    %1093 = vst.msk [vmem:[#allocation4 + $0x30] sm:$0xff] %vm1089, %v1084
    %v1094 = vld [vmem:[#allocation3 + $0x5] sm:$0xff]
    %v1095 = vld [vmem:[#allocation3 + $0xd] sm:$0xff]
    %v1096 = vld [vmem:[#allocation3 + $0x25] sm:$0xff]
    %v1097 = vld [vmem:[#allocation3 + $0x2d] sm:$0xff]
    %1102 = vrot.lane.b32.xlu0 %v1094, 80
    %v1103 = vpop.permute.xlu0 %1102
    %1104 = vrot.lane.b32.xlu0 %v1095, 80
    %v1105 = vpop.permute.xlu0 %1104
    %1106 = vrot.lane.b32.xlu0 %v1096, 80
    %v1107 = vpop.permute.xlu0 %1106
    %1108 = vrot.lane.b32.xlu0 %v1097, 80
    %v1109 = vpop.permute.xlu0 %1108
    %vm1114 = vcmask 786048
    %1115 = vst.msk [vmem:[#allocation4] sm:$0xff] %vm1114, %v1103
    %1116 = vst.msk [vmem:[#allocation4 + $0x10] sm:$0xff] %vm1114, %v1105
    %1117 = vst.msk [vmem:[#allocation4 + $0x20] sm:$0xff] %vm1114, %v1107
    %1118 = vst.msk [vmem:[#allocation4 + $0x30] sm:$0xff] %vm1114, %v1109
    %v1119 = vld [vmem:[#allocation3 + $0x6] sm:$0xff]
    %v1120 = vld [vmem:[#allocation3 + $0xe] sm:$0xff]
    %v1121 = vld [vmem:[#allocation3 + $0x26] sm:$0xff]
    %v1122 = vld [vmem:[#allocation3 + $0x2e] sm:$0xff]
    %1127 = vrot.lane.b32.xlu0 %v1119, 96
    %v1128 = vpop.permute.xlu0 %1127
    %1129 = vrot.lane.b32.xlu0 %v1120, 96
    %v1130 = vpop.permute.xlu0 %1129
    %1131 = vrot.lane.b32.xlu0 %v1121, 96
    %v1132 = vpop.permute.xlu0 %1131
    %1133 = vrot.lane.b32.xlu0 %v1122, 96
    %v1134 = vpop.permute.xlu0 %1133
    %vm1139 = vcmask 917248
    %1140 = vst.msk [vmem:[#allocation4] sm:$0xff] %vm1139, %v1128
    %1141 = vst.msk [vmem:[#allocation4 + $0x10] sm:$0xff] %vm1139, %v1130
    %1142 = vst.msk [vmem:[#allocation4 + $0x20] sm:$0xff] %vm1139, %v1132
    %1143 = vst.msk [vmem:[#allocation4 + $0x30] sm:$0xff] %vm1139, %v1134
    %v1144 = vld [vmem:[#allocation3 + $0x7] sm:$0xff]
    %v1145 = vld [vmem:[#allocation3 + $0xf] sm:$0xff]
    %v1146 = vld [vmem:[#allocation3 + $0x27] sm:$0xff]
    %v1147 = vld [vmem:[#allocation3 + $0x2f] sm:$0xff]
    %1152 = vrot.lane.b32.xlu0 %v1144, 112
    %v1153 = vpop.permute.xlu0 %1152
    %1154 = vrot.lane.b32.xlu0 %v1145, 112
    %v1155 = vpop.permute.xlu0 %1154
    %1156 = vrot.lane.b32.xlu0 %v1146, 112
    %v1157 = vpop.permute.xlu0 %1156
    %1158 = vrot.lane.b32.xlu0 %v1147, 112
    %v1159 = vpop.permute.xlu0 %1158
    %vm1164 = vcmask 1048448
    %1165 = vst.msk [vmem:[#allocation4] sm:$0xff] %vm1164, %v1153
    %1166 = vst.msk [vmem:[#allocation4 + $0x10] sm:$0xff] %vm1164, %v1155
    %1167 = vst.msk [vmem:[#allocation4 + $0x20] sm:$0xff] %vm1164, %v1157
    %1168 = vst.msk [vmem:[#allocation4 + $0x30] sm:$0xff] %vm1164, %v1159
    %v1169 = vld [vmem:[#allocation3 + $0x8] sm:$0xff]
    %v1170 = vld [vmem:[#allocation3 + $0x10] sm:$0xff]
    %v1171 = vld [vmem:[#allocation3 + $0x28] sm:$0xff]
    %v1172 = vld [vmem:[#allocation3 + $0x30] sm:$0xff]
    %1173 = vst.msk [vmem:[#allocation4 + $0x8] sm:$0xff] %vm715, %v1169
    %1174 = vst.msk [vmem:[#allocation4 + $0x18] sm:$0xff] %vm715, %v1170
    %1175 = vst.msk [vmem:[#allocation4 + $0x28] sm:$0xff] %vm715, %v1171
    %1176 = vst.msk [vmem:[#allocation4 + $0x38] sm:$0xff] %vm715, %v1172
    %v1177 = vld [vmem:[#allocation3 + $0x9] sm:$0xff]
    %v1178 = vld [vmem:[#allocation3 + $0x11] sm:$0xff]
    %v1179 = vld [vmem:[#allocation3 + $0x29] sm:$0xff]
    %v1180 = vld [vmem:[#allocation3 + $0x31] sm:$0xff]
    %1185 = vrot.lane.b32.xlu0 %v1177, 16
    %v1186 = vpop.permute.xlu0 %1185
    %1187 = vrot.lane.b32.xlu0 %v1178, 16
    %v1188 = vpop.permute.xlu0 %1187
    %1189 = vrot.lane.b32.xlu0 %v1179, 16
    %v1190 = vpop.permute.xlu0 %1189
    %1191 = vrot.lane.b32.xlu0 %v1180, 16
    %v1192 = vpop.permute.xlu0 %1191
    %1197 = vst.msk [vmem:[#allocation4 + $0x8] sm:$0xff] %vm1014, %v1186
    %1198 = vst.msk [vmem:[#allocation4 + $0x18] sm:$0xff] %vm1014, %v1188
    %1199 = vst.msk [vmem:[#allocation4 + $0x28] sm:$0xff] %vm1014, %v1190
    %1200 = vst.msk [vmem:[#allocation4 + $0x38] sm:$0xff] %vm1014, %v1192
    %v1201 = vld [vmem:[#allocation3 + $0xa] sm:$0xff]
    %v1202 = vld [vmem:[#allocation3 + $0x12] sm:$0xff]
    %v1203 = vld [vmem:[#allocation3 + $0x2a] sm:$0xff]
    %v1204 = vld [vmem:[#allocation3 + $0x32] sm:$0xff]
    %1209 = vrot.lane.b32.xlu0 %v1201, 32
    %v1210 = vpop.permute.xlu0 %1209
    %1211 = vrot.lane.b32.xlu0 %v1202, 32
    %v1212 = vpop.permute.xlu0 %1211
    %1213 = vrot.lane.b32.xlu0 %v1203, 32
    %v1214 = vpop.permute.xlu0 %1213
    %1215 = vrot.lane.b32.xlu0 %v1204, 32
    %v1216 = vpop.permute.xlu0 %1215
    %1221 = vst.msk [vmem:[#allocation4 + $0x8] sm:$0xff] %vm1039, %v1210
    %1222 = vst.msk [vmem:[#allocation4 + $0x18] sm:$0xff] %vm1039, %v1212
    %1223 = vst.msk [vmem:[#allocation4 + $0x28] sm:$0xff] %vm1039, %v1214
    %1224 = vst.msk [vmem:[#allocation4 + $0x38] sm:$0xff] %vm1039, %v1216
    %v1225 = vld [vmem:[#allocation4] sm:$0xff]
    %v1226 = vld [vmem:[#allocation4 + $0x8] sm:$0xff]
    %v1227 = vld [vmem:[#allocation4 + $0x10] sm:$0xff]
    %v1228 = vld [vmem:[#allocation4 + $0x18] sm:$0xff]
    %v1229 = vld [vmem:[#allocation4 + $0x20] sm:$0xff]
    %v1230 = vld [vmem:[#allocation4 + $0x28] sm:$0xff]
    %v1231 = vld [vmem:[#allocation4 + $0x30] sm:$0xff]
    %v1232 = vld [vmem:[#allocation4 + $0x38] sm:$0xff]
    %v1233 = vld [vmem:[%s4] sm:$0xff]
    %v1234 = vld [vmem:[%s4 + $0x8] sm:$0xff]
    %v1235 = vld [vmem:[%s4 + $0x10] sm:$0xff]
    %v1236 = vld [vmem:[%s4 + $0x18] sm:$0xff]
    %v1237 = vld [vmem:[%s4 + $0x20] sm:$0xff]
    %v1238 = vld [vmem:[%s4 + $0x28] sm:$0xff]
    %v1239 = vld [vmem:[%s4 + $0x30] sm:$0xff]
    %v1240 = vld [vmem:[%s4 + $0x38] sm:$0xff]
    %v1241 = vld [vmem:[%s4 + $0x40] sm:$0xff]
    %v1242 = vld [vmem:[%s4 + $0x48] sm:$0xff]
    %v1243 = vld [vmem:[%s4 + $0x50] sm:$0xff]
    %v1244 = vld [vmem:[%s4 + $0x58] sm:$0xff]
    %v1245 = vld [vmem:[%s4 + $0x60] sm:$0xff]
    %v1246 = vld [vmem:[%s4 + $0x68] sm:$0xff]
    %v1247 = vld [vmem:[%s4 + $0x70] sm:$0xff]
    %v1248 = vld [vmem:[%s4 + $0x78] sm:$0xff]
    %v1249 = vld [vmem:[%s4 + $0x80] sm:$0xff]
    %v1250 = vld [vmem:[%s4 + $0x88] sm:$0xff]
    %v1251 = vld [vmem:[%s4 + $0x90] sm:$0xff]
    %v1252 = vld [vmem:[%s4 + $0x98] sm:$0xff]
    %v1253 = vld [vmem:[%s4 + $0xa0] sm:$0xff]
    %v1254 = vld [vmem:[%s4 + $0xa8] sm:$0xff]
    %vm1255 = vcmask 392192
    %v1257 = vsel %vm1255, %v1226, 0
    %v1260 = vsel %vm1255, %v1228, 0
    %v1263 = vsel %vm1255, %v1230, 0
    %v1266 = vsel %vm1255, %v1232, 0
    %1268 = vmatprep.subr.mxu0 0.0
    %1269 = vmatpush1.msra.mxu0 %v1233
    %1270 = vmatprep.subr.mxu0 0.0
    %1271 = vmatpush1.msra.mxu0 %v1234
    %1272 = vmatprep.subr.mxu0 0.0
    %1273 = vmatpush1.msra.mxu0 %v1235
    %1274 = vmatprep.subr.mxu0 0.0
    %1275 = vmatpush1.msra.mxu0 %v1236
    %1276 = vmatprep.subr.mxu0 0.0
    %1277 = vmatpush1.msra.mxu0 %v1237
    %1278 = vmatprep.subr.mxu0 0.0
    %1279 = vmatpush1.msra.mxu0 %v1238
    %1280 = vmatprep.subr.mxu0 0.0
    %1281 = vmatpush1.msra.mxu0 %v1239
    %1282 = vmatprep.subr.mxu0 0.0
    %1283 = vmatpush1.msra.mxu0 %v1240
    %1284 = vmatprep.subr.mxu0 0.0
    %1285 = vmatpush1.msra.mxu0 %v1241
    %1286 = vmatprep.subr.mxu0 0.0
    %1287 = vmatpush1.msra.mxu0 %v1242
    %1288 = vmatprep.subr.mxu0 0.0
    %1289 = vmatpush1.msra.mxu0 %v1243
    %1290 = vmatprep.subr.mxu0 0.0
    %1291 = vmatpush1.msra.mxu0 %v1244
    %1292 = vmatprep.subr.mxu0 0.0
    %1293 = vmatpush1.msra.mxu0 %v1245
    %1294 = vmatprep.subr.mxu0 0.0
    %1295 = vmatpush1.msra.mxu0 %v1246
    %1296 = vmatprep.subr.mxu0 0.0
    %1297 = vmatpush1.msra.mxu0 %v1247
    %1298 = vmatprep.subr.mxu0 0.0
    %1299 = vmatpush1.msra.mxu0 %v1248
    %1300 = vmatprep.subr.mxu0 0.0
    %1301 = vmatpush1.msra.mxu0 %v1249
    %1302 = vmatprep.subr.mxu0 0.0
    %1303 = vmatpush1.msra.mxu0 %v1250
    %1304 = vmatprep.subr.mxu0 0.0
    %1305 = vmatpush1.msra.mxu0 %v1251
    %1306 = vmatprep.subr.mxu0 0.0
    %1307 = vmatpush1.msra.mxu0 %v1252
    %1308 = vmatprep.subr.mxu0 0.0
    %1309 = vmatpush1.msra.mxu0 %v1253
    %1310 = vmatprep.subr.mxu0 0.0
    %1311 = vmatpush1.msra.mxu0 %v1254
    %1312 = vmatprep.subr.mxu0 0.0
    %1313 = vmatpush1.msra.mxu0 0.0
    %1314 = vmatprep.subr.mxu0 0.0
    %1315 = vmatpush1.msra.mxu0 0.0
    %1316 = vmatprep.subr.mxu0 0.0
    %1317 = vmatpush1.msra.mxu0 0.0
    %1318 = vmatprep.subr.mxu0 0.0
    %1319 = vmatpush1.msra.mxu0 0.0
    %1320 = vmatprep.subr.mxu0 0.0
    %1321 = vmatpush1.msra.mxu0 0.0
    %1322 = vmatprep.subr.mxu0 0.0
    %1323 = vmatpush1.msra.mxu0 0.0
    %1324 = vmatprep.subr.mxu0 0.0
    %1325 = vmatpush1.msra.mxu0 0.0
    %1326 = vmatprep.subr.mxu0 0.0
    %1327 = vmatpush1.msra.mxu0 0.0
    %1328 = vmatprep.subr.mxu0 0.0
    %1329 = vmatpush1.msra.mxu0 0.0
    %1330 = vmatprep.subr.mxu0 0.0
    %1331 = vmatpush1.msra.mxu0 0.0
    %1332 = vmatprep.mubr.f32.mxu0 %v1257
    %1333 = vmatmul.mubr.f32.gmra.mrb[0].mxu0 %v1225
    %v1334 = vpop.f32.mrb[0].mxu0
    %v1335 = vadd.f32 0.0, %v1334
    %v1336 = vpop.f32.mrb[0].mxu0
    %1337 = vmatprep.mubr.f32.mxu0 %v1260
    %1338 = vmatmul.mubr.f32.gmra.mrb[0].mxu0 %v1227
    %v1339 = vpop.f32.mrb[0].mxu0
    %v1340 = vadd.f32 0.0, %v1339
    %v1341 = vpop.f32.mrb[0].mxu0
    %1342 = vmatprep.mubr.f32.mxu0 %v1263
    %1343 = vmatmul.mubr.f32.gmra.mrb[0].mxu0 %v1229
    %v1344 = vpop.f32.mrb[0].mxu0
    %v1345 = vadd.f32 0.0, %v1344
    %v1346 = vpop.f32.mrb[0].mxu0
    %1347 = vmatprep.mubr.f32.mxu0 %v1266
    %1348 = vmatmul.mubr.f32.gmra.mrb[0].mxu0 %v1231
    %v1349 = vpop.f32.mrb[0].mxu0
    %v1350 = vadd.f32 0.0, %v1349
    %v1351 = vpop.f32.mrb[0].mxu0
    %1352 = vdwg.mxu0
    %vm1353 = vcmask 261120
    %v1354 = vsel %vm1353, %v1335, 0.0
    %v1355 = vsel %vm1353, %v1340, 0.0
    %v1356 = vadd.f32 %v1354, %v1355
    %v1357 = vsel %vm1353, %v1345, 0.0
    %v1358 = vadd.f32 %v1356, %v1357
    %v1359 = vsel %vm1353, %v1350, 0.0
    %v1360 = vadd.f32 %v1358, %v1359
    %v1361 = vrot.slane %v1360, 4
    %v1362 = vadd.f32 %v1360, %v1361
    %v1363 = vrot.slane %v1362, 2
    %v1364 = vadd.f32 %v1362, %v1363
    %v1365 = vrot.slane %v1364, 1
    %v1366 = vadd.f32 %v1364, %v1365
    %v1367 = vmul.f32 %v1366, 0.03125
    %v1368 = vmul.f32 %v1335, %v1335
    %v1369 = vmul.f32 %v1340, %v1340
    %v1370 = vmul.f32 %v1345, %v1345
    %v1371 = vmul.f32 %v1350, %v1350
    %v1372 = vsel %vm1353, %v1368, 0.0
    %v1373 = vsel %vm1353, %v1369, 0.0
    %v1374 = vadd.f32 %v1372, %v1373
    %v1375 = vsel %vm1353, %v1370, 0.0
    %v1376 = vadd.f32 %v1374, %v1375
    %v1377 = vsel %vm1353, %v1371, 0.0
    %v1378 = vadd.f32 %v1376, %v1377
    %v1379 = vrot.slane %v1378, 4
    %v1380 = vadd.f32 %v1378, %v1379
    %v1381 = vrot.slane %v1380, 2
    %v1382 = vadd.f32 %v1380, %v1381
    %v1383 = vrot.slane %v1382, 1
    %v1384 = vadd.f32 %v1382, %v1383
    %v1385 = vmul.f32 %v1384, 0.03125
    %v1386 = vmul.f32 %v1367, %v1367
    %v1387 = vsub.f32 %v1385, %v1386
    %v1388 = vsub.f32 %v1335, %v1367
    %v1389 = vsub.f32 %v1340, %v1367
    %v1390 = vsub.f32 %v1345, %v1367
    %v1391 = vsub.f32 %v1350, %v1367
    %v1392 = vld [vmem:[%s5] sm:$0x1]
    %v1393 = vadd.f32 %v1387, 1e-05
    %v1394 = vrsqrt.pop %v1393
    %v1395 = vmul.f32 %v1392, %v1394
    %v1397 = vlaneseq
    %v1398 = vshrl.u32 %v1397, 7
    %v1399 = vsub.s32 0, %v1398
    %v1400 = vrot.slane %v1395, %v1399
    %v1402 = vmul.f32 %v1388, %v1400
    %v1403 = vmul.f32 %v1389, %v1400
    %v1404 = vmul.f32 %v1390, %v1400
    %v1405 = vmul.f32 %v1391, %v1400
    %v1406 = vld [vmem:[%s6] sm:$0x1]
    %v1408 = vlaneseq
    %v1409 = vshrl.u32 %v1408, 7
    %v1410 = vsub.s32 0, %v1409
    %v1411 = vrot.slane %v1406, %v1410
    %v1413 = vadd.f32 %v1402, %v1411
    %v1414 = vadd.f32 %v1403, %v1411
    %v1415 = vadd.f32 %v1404, %v1411
    %v1416 = vadd.f32 %v1405, %v1411
    %vm1417 = vcmp.gt.f32.partialorder %v1413, 0.0
    %vm1418 = vcmp.gt.f32.partialorder %v1414, 0.0
    %vm1419 = vcmp.gt.f32.partialorder %v1415, 0.0
    %vm1420 = vcmp.gt.f32.partialorder %v1416, 0.0
    %v1421 = vmin.f32 %v1413, 0.0
    %v1422 = vmin.f32 %v1414, 0.0
    %v1423 = vmin.f32 %v1415, 0.0
    %v1424 = vmin.f32 %v1416, 0.0
    %v1425 = vmul.f32 %v1421, 1.442695
    %v1426 = vpow.pop %v1425
    %v1427 = vmul.f32 %v1422, 1.442695
    %v1428 = vpow.pop %v1427
    %v1429 = vmul.f32 %v1423, 1.442695
    %v1430 = vpow.pop %v1429
    %v1431 = vmul.f32 %v1424, 1.442695
    %v1432 = vpow.pop %v1431
    %v1433 = vsub.f32 %v1426, 1.0
    %v1434 = vsub.f32 %v1428, 1.0
    %v1435 = vsub.f32 %v1430, 1.0
    %v1436 = vsub.f32 %v1432, 1.0
    %v1437 = vmul.f32 %v1433, 1.6732632
    %v1438 = vmul.f32 %v1434, 1.6732632
    %v1439 = vmul.f32 %v1435, 1.6732632
    %v1440 = vmul.f32 %v1436, 1.6732632
    %v1441 = vsel %vm1417, %v1413, %v1437
    %v1442 = vsel %vm1418, %v1414, %v1438
    %v1443 = vsel %vm1419, %v1415, %v1439
    %v1444 = vsel %vm1420, %v1416, %v1440
    %v1445 = vmul.f32 %v1441, 1.050701
    %v1446 = vmul.f32 %v1442, 1.050701
    %v1447 = vmul.f32 %v1443, 1.050701
    %v1448 = vmul.f32 %v1444, 1.050701
    %v1449 = vld [vmem:[%s11] sm:$0xff]
    %v1450 = vld [vmem:[%s11 + $0x8] sm:$0xff]
    %v1452 = vsel %vm1353, %v1449, 0
    %v1455 = vsel %vm1353, %v1450, 0
    %1457 = vmatprep.subr.mxu0 0.0
    %1458 = vmatpush1.msra.mxu0 %v1445
    %1459 = vmatprep.subr.mxu0 0.0
    %1460 = vmatpush1.msra.mxu0 %v1446
    %1461 = vmatprep.subr.mxu0 0.0
    %1462 = vmatpush1.msra.mxu0 %v1447
    %1463 = vmatprep.subr.mxu0 0.0
    %1464 = vmatpush1.msra.mxu0 %v1448
    %1465 = vmatprep.subr.mxu0 0.0
    %1466 = vmatpush1.msra.mxu0 0.0
    %1467 = vmatprep.subr.mxu0 0.0
    %1468 = vmatpush1.msra.mxu0 0.0
    %1469 = vmatprep.subr.mxu0 0.0
    %1470 = vmatpush1.msra.mxu0 0.0
    %1471 = vmatprep.subr.mxu0 0.0
    %1472 = vmatpush1.msra.mxu0 0.0
    %1473 = vmatprep.subr.mxu0 0.0
    %1474 = vmatpush1.msra.mxu0 0.0
    %1475 = vmatprep.subr.mxu0 0.0
    %1476 = vmatpush1.msra.mxu0 0.0
    %1477 = vmatprep.subr.mxu0 0.0
    %1478 = vmatpush1.msra.mxu0 0.0
    %1479 = vmatprep.subr.mxu0 0.0
    %1480 = vmatpush1.msra.mxu0 0.0
    %1481 = vmatprep.subr.mxu0 0.0
    %1482 = vmatpush1.msra.mxu0 0.0
    %1483 = vmatprep.subr.mxu0 0.0
    %1484 = vmatpush1.msra.mxu0 0.0
    %1485 = vmatprep.subr.mxu0 0.0
    %1486 = vmatpush1.msra.mxu0 0.0
    %1487 = vmatprep.subr.mxu0 0.0
    %1488 = vmatpush1.msra.mxu0 0.0
    %1489 = vmatprep.subr.mxu0 0.0
    %1490 = vmatpush1.msra.mxu0 0.0
    %1491 = vmatprep.subr.mxu0 0.0
    %1492 = vmatpush1.msra.mxu0 0.0
    %1493 = vmatprep.subr.mxu0 0.0
    %1494 = vmatpush1.msra.mxu0 0.0
    %1495 = vmatprep.subr.mxu0 0.0
    %1496 = vmatpush1.msra.mxu0 0.0
    %1497 = vmatprep.subr.mxu0 0.0
    %1498 = vmatpush1.msra.mxu0 0.0
    %1499 = vmatprep.subr.mxu0 0.0
    %1500 = vmatpush1.msra.mxu0 0.0
    %1501 = vmatprep.subr.mxu0 0.0
    %1502 = vmatpush1.msra.mxu0 0.0
    %1503 = vmatprep.subr.mxu0 0.0
    %1504 = vmatpush1.msra.mxu0 0.0
    %1505 = vmatprep.subr.mxu0 0.0
    %1506 = vmatpush1.msra.mxu0 0.0
    %1507 = vmatprep.subr.mxu0 0.0
    %1508 = vmatpush1.msra.mxu0 0.0
    %1509 = vmatprep.subr.mxu0 0.0
    %1510 = vmatpush1.msra.mxu0 0.0
    %1511 = vmatprep.subr.mxu0 0.0
    %1512 = vmatpush1.msra.mxu0 0.0
    %1513 = vmatprep.subr.mxu0 0.0
    %1514 = vmatpush1.msra.mxu0 0.0
    %1515 = vmatprep.subr.mxu0 0.0
    %1516 = vmatpush1.msra.mxu0 0.0
    %1517 = vmatprep.subr.mxu0 0.0
    %1518 = vmatpush1.msra.mxu0 0.0
    %1519 = vmatprep.subr.mxu0 0.0
    %1520 = vmatpush1.msra.mxu0 0.0
    %1521 = vmatprep.mubr.f32.mxu0 0.0
    %1522 = vmatmul.mubr.f32.gmra.mrb[0].mxu0 %v1452
    %v1523 = vpop.f32.mrb[0].mxu0
    %v1524 = vadd.f32 0.0, %v1523
    %v1525 = vpop.f32.mrb[0].mxu0
    %1526 = vmatprep.mubr.f32.mxu0 0.0
    %1527 = vmatmul.mubr.f32.gmra.mrb[0].mxu0 %v1455
    %v1528 = vpop.f32.mrb[0].mxu0
    %v1529 = vadd.f32 0.0, %v1528
    %v1530 = vpop.f32.mrb[0].mxu0
    %1531 = vdwg.mxu0
    %vm1532 = vcmask 258048
    %1533 = vst.msk [vmem:[#allocation5] sm:$0x1f] %vm1532, 0.0
    %1534 = vst.msk [vmem:[#allocation5 + $0x18] sm:$0x1f] %vm1532, 0.0
    %1535 = vst.msk [vmem:[#allocation5 + $0xd] sm:$0x1f] %vm1532, 0.0
    %1536 = vst.msk [vmem:[#allocation5 + $0x25] sm:$0x1f] %vm1532, 0.0
    %1537 = vst.msk [vmem:[#allocation5 + $0x5] sm:$0xff] %vm1353, %v1524
    %1538 = vst.msk [vmem:[#allocation5 + $0x1d] sm:$0xff] %vm1353, %v1529
    %v1539 = vld [vmem:[#allocation5] sm:$0xff]
    %v1540 = vld [vmem:[#allocation5 + $0x18] sm:$0xff]
    %1541 = vst.msk [vmem:[#allocation6] sm:$0xff] %vm1353, %v1539
    %1542 = vst.msk [vmem:[#allocation6 + $0x18] sm:$0xff] %vm1353, %v1540
    %v1543 = vld [vmem:[#allocation5 + $0x1] sm:$0xff]
    %v1544 = vld [vmem:[#allocation5 + $0x19] sm:$0xff]
    %1547 = vrot.lane.b32.xlu0 %v1543, 32
    %v1548 = vpop.permute.xlu0 %1547
    %1549 = vrot.lane.b32.xlu0 %v1544, 32
    %v1550 = vpop.permute.xlu0 %1549
    %vm1553 = vcmask 523520
    %1554 = vst.msk [vmem:[#allocation6] sm:$0xff] %vm1553, %v1548
    %1555 = vst.msk [vmem:[#allocation6 + $0x18] sm:$0xff] %vm1553, %v1550
    %v1556 = vld [vmem:[#allocation5 + $0x2] sm:$0xff]
    %v1557 = vld [vmem:[#allocation5 + $0x1a] sm:$0xff]
    %1560 = vrot.lane.b32.xlu0 %v1556, 64
    %v1561 = vpop.permute.xlu0 %1560
    %1562 = vrot.lane.b32.xlu0 %v1557, 64
    %v1563 = vpop.permute.xlu0 %1562
    %vm1566 = vcmask 785920
    %1567 = vst.msk [vmem:[#allocation6] sm:$0xff] %vm1566, %v1561
    %1568 = vst.msk [vmem:[#allocation6 + $0x18] sm:$0xff] %vm1566, %v1563
    %v1569 = vld [vmem:[#allocation5 + $0x3] sm:$0xff]
    %v1570 = vld [vmem:[#allocation5 + $0x1b] sm:$0xff]
    %1573 = vrot.lane.b32.xlu0 %v1569, 96
    %v1574 = vpop.permute.xlu0 %1573
    %1575 = vrot.lane.b32.xlu0 %v1570, 96
    %v1576 = vpop.permute.xlu0 %1575
    %vm1579 = vcmask 1048320
    %1580 = vst.msk [vmem:[#allocation6] sm:$0xff] %vm1579, %v1574
    %1581 = vst.msk [vmem:[#allocation6 + $0x18] sm:$0xff] %vm1579, %v1576
    %v1582 = vld [vmem:[#allocation5 + $0x4] sm:$0xff]
    %v1583 = vld [vmem:[#allocation5 + $0x1c] sm:$0xff]
    %1584 = vst.msk [vmem:[#allocation6 + $0x8] sm:$0xff] %vm1353, %v1582
    %1585 = vst.msk [vmem:[#allocation6 + $0x20] sm:$0xff] %vm1353, %v1583
    %v1586 = vld [vmem:[#allocation5 + $0x5] sm:$0xff]
    %v1587 = vld [vmem:[#allocation5 + $0x1d] sm:$0xff]
    %1590 = vrot.lane.b32.xlu0 %v1586, 32
    %v1591 = vpop.permute.xlu0 %1590
    %1592 = vrot.lane.b32.xlu0 %v1587, 32
    %v1593 = vpop.permute.xlu0 %1592
    %1596 = vst.msk [vmem:[#allocation6 + $0x8] sm:$0xff] %vm1553, %v1591
    %1597 = vst.msk [vmem:[#allocation6 + $0x20] sm:$0xff] %vm1553, %v1593
    %v1598 = vld [vmem:[#allocation5 + $0x6] sm:$0xff]
    %v1599 = vld [vmem:[#allocation5 + $0x1e] sm:$0xff]
    %1602 = vrot.lane.b32.xlu0 %v1598, 64
    %v1603 = vpop.permute.xlu0 %1602
    %1604 = vrot.lane.b32.xlu0 %v1599, 64
    %v1605 = vpop.permute.xlu0 %1604
    %1608 = vst.msk [vmem:[#allocation6 + $0x8] sm:$0xff] %vm1566, %v1603
    %1609 = vst.msk [vmem:[#allocation6 + $0x20] sm:$0xff] %vm1566, %v1605
    %v1610 = vld [vmem:[#allocation5 + $0x7] sm:$0xff]
    %v1611 = vld [vmem:[#allocation5 + $0x1f] sm:$0xff]
    %1614 = vrot.lane.b32.xlu0 %v1610, 96
    %v1615 = vpop.permute.xlu0 %1614
    %1616 = vrot.lane.b32.xlu0 %v1611, 96
    %v1617 = vpop.permute.xlu0 %1616
    %1620 = vst.msk [vmem:[#allocation6 + $0x8] sm:$0xff] %vm1579, %v1615
    %1621 = vst.msk [vmem:[#allocation6 + $0x20] sm:$0xff] %vm1579, %v1617
    %v1622 = vld [vmem:[#allocation5 + $0x8] sm:$0xff]
    %v1623 = vld [vmem:[#allocation5 + $0x20] sm:$0xff]
    %1624 = vst.msk [vmem:[#allocation6 + $0x10] sm:$0xff] %vm1353, %v1622
    %1625 = vst.msk [vmem:[#allocation6 + $0x28] sm:$0xff] %vm1353, %v1623
    %v1626 = vld [vmem:[#allocation5 + $0x9] sm:$0xff]
    %v1627 = vld [vmem:[#allocation5 + $0x21] sm:$0xff]
    %1630 = vrot.lane.b32.xlu0 %v1626, 32
    %v1631 = vpop.permute.xlu0 %1630
    %1632 = vrot.lane.b32.xlu0 %v1627, 32
    %v1633 = vpop.permute.xlu0 %1632
    %1636 = vst.msk [vmem:[#allocation6 + $0x10] sm:$0xff] %vm1553, %v1631
    %1637 = vst.msk [vmem:[#allocation6 + $0x28] sm:$0xff] %vm1553, %v1633
    %v1638 = vld [vmem:[#allocation5 + $0xa] sm:$0xff]
    %v1639 = vld [vmem:[#allocation5 + $0x22] sm:$0xff]
    %1642 = vrot.lane.b32.xlu0 %v1638, 64
    %v1643 = vpop.permute.xlu0 %1642
    %1644 = vrot.lane.b32.xlu0 %v1639, 64
    %v1645 = vpop.permute.xlu0 %1644
    %1648 = vst.msk [vmem:[#allocation6 + $0x10] sm:$0xff] %vm1566, %v1643
    %1649 = vst.msk [vmem:[#allocation6 + $0x28] sm:$0xff] %vm1566, %v1645
    %v1650 = vld [vmem:[#allocation6] sm:$0xff]
    %v1651 = vld [vmem:[#allocation6 + $0x8] sm:$0xff]
    %v1652 = vld [vmem:[#allocation6 + $0x10] sm:$0xff]
    %v1653 = vld [vmem:[#allocation6 + $0x18] sm:$0xff]
    %v1654 = vld [vmem:[#allocation6 + $0x20] sm:$0xff]
    %v1655 = vld [vmem:[#allocation6 + $0x28] sm:$0xff]
    %v1656 = vld [vmem:[%s7] sm:$0xff]
    %v1657 = vld [vmem:[%s7 + $0x8] sm:$0xff]
    %v1658 = vld [vmem:[%s7 + $0x10] sm:$0xff]
    %v1659 = vld [vmem:[%s7 + $0x18] sm:$0xff]
    %v1660 = vld [vmem:[%s7 + $0x20] sm:$0xff]
    %v1661 = vld [vmem:[%s7 + $0x28] sm:$0xff]
    %v1662 = vld [vmem:[%s7 + $0x30] sm:$0xff]
    %v1663 = vld [vmem:[%s7 + $0x38] sm:$0xff]
    %v1664 = vld [vmem:[%s7 + $0x40] sm:$0xff]
    %v1665 = vld [vmem:[%s7 + $0x48] sm:$0xff]
    %v1666 = vld [vmem:[%s7 + $0x50] sm:$0xff]
    %v1667 = vld [vmem:[%s7 + $0x58] sm:$0xff]
    %v1668 = vld [vmem:[%s7 + $0x60] sm:$0xff]
    %v1669 = vld [vmem:[%s7 + $0x68] sm:$0xff]
    %v1670 = vld [vmem:[%s7 + $0x70] sm:$0xff]
    %v1671 = vld [vmem:[%s7 + $0x78] sm:$0xff]
    %v1672 = vld [vmem:[%s7 + $0x80] sm:$0xff]
    %v1673 = vld [vmem:[%s7 + $0x88] sm:$0xff]
    %v1674 = vld [vmem:[%s7 + $0x90] sm:$0xff]
    %v1675 = vld [vmem:[%s7 + $0x98] sm:$0xff]
    %v1676 = vld [vmem:[%s7 + $0xa0] sm:$0xff]
    %v1677 = vld [vmem:[%s7 + $0xa8] sm:$0xff]
    %v1678 = vld [vmem:[%s7 + $0xb0] sm:$0xff]
    %v1679 = vld [vmem:[%s7 + $0xb8] sm:$0xff]
    %v1680 = vld [vmem:[%s7 + $0xc0] sm:$0xff]
    %v1681 = vld [vmem:[%s7 + $0xc8] sm:$0xff]
    %v1682 = vld [vmem:[%s7 + $0xd0] sm:$0xff]
    %v1683 = vld [vmem:[%s7 + $0xd8] sm:$0xff]
    %v1684 = vld [vmem:[%s7 + $0xe0] sm:$0xff]
    %v1685 = vld [vmem:[%s7 + $0xe8] sm:$0xff]
    %v1686 = vld [vmem:[%s7 + $0xf0] sm:$0xff]
    %v1687 = vld [vmem:[%s7 + $0xf8] sm:$0xff]
    %v1688 = vld [vmem:[%s7 + $0x100] sm:$0xff]
    %v1689 = vld [vmem:[%s7 + $0x108] sm:$0xff]
    %v1690 = vld [vmem:[%s7 + $0x110] sm:$0xff]
    %v1691 = vld [vmem:[%s7 + $0x118] sm:$0xff]
    %v1692 = vld [vmem:[%s7 + $0x120] sm:$0xff]
    %v1693 = vld [vmem:[%s7 + $0x128] sm:$0xff]
    %v1694 = vld [vmem:[%s7 + $0x130] sm:$0xff]
    %v1695 = vld [vmem:[%s7 + $0x138] sm:$0xff]
    %v1696 = vld [vmem:[%s7 + $0x140] sm:$0xff]
    %v1697 = vld [vmem:[%s7 + $0x148] sm:$0xff]
    %v1698 = vld [vmem:[%s7 + $0x150] sm:$0xff]
    %v1699 = vld [vmem:[%s7 + $0x158] sm:$0xff]
    %vm1700 = vcmask 785408
    %v1702 = vsel %vm1700, %v1652, 0
    %v1705 = vsel %vm1700, %v1655, 0
    %1707 = vmatprep.subr.mxu0 0.0
    %1708 = vmatpush1.msra.mxu0 %v1656
    %1709 = vmatprep.subr.mxu0 0.0
    %1710 = vmatpush1.msra.mxu0 %v1657
    %1711 = vmatprep.subr.mxu0 0.0
    %1712 = vmatpush1.msra.mxu0 %v1658
    %1713 = vmatprep.subr.mxu0 0.0
    %1714 = vmatpush1.msra.mxu0 %v1659
    %1715 = vmatprep.subr.mxu0 0.0
    %1716 = vmatpush1.msra.mxu0 %v1660
    %1717 = vmatprep.subr.mxu0 0.0
    %1718 = vmatpush1.msra.mxu0 %v1661
    %1719 = vmatprep.subr.mxu0 0.0
    %1720 = vmatpush1.msra.mxu0 %v1662
    %1721 = vmatprep.subr.mxu0 0.0
    %1722 = vmatpush1.msra.mxu0 %v1663
    %1723 = vmatprep.subr.mxu0 0.0
    %1724 = vmatpush1.msra.mxu0 %v1664
    %1725 = vmatprep.subr.mxu0 0.0
    %1726 = vmatpush1.msra.mxu0 %v1665
    %1727 = vmatprep.subr.mxu0 0.0
    %1728 = vmatpush1.msra.mxu0 %v1666
    %1729 = vmatprep.subr.mxu0 0.0
    %1730 = vmatpush1.msra.mxu0 %v1667
    %1731 = vmatprep.subr.mxu0 0.0
    %1732 = vmatpush1.msra.mxu0 %v1668
    %1733 = vmatprep.subr.mxu0 0.0
    %1734 = vmatpush1.msra.mxu0 %v1669
    %1735 = vmatprep.subr.mxu0 0.0
    %1736 = vmatpush1.msra.mxu0 %v1670
    %1737 = vmatprep.subr.mxu0 0.0
    %1738 = vmatpush1.msra.mxu0 %v1671
    %1739 = vmatprep.subr.mxu0 0.0
    %1740 = vmatpush1.msra.mxu0 %v1672
    %1741 = vmatprep.subr.mxu0 0.0
    %1742 = vmatpush1.msra.mxu0 %v1673
    %1743 = vmatprep.subr.mxu0 0.0
    %1744 = vmatpush1.msra.mxu0 %v1674
    %1745 = vmatprep.subr.mxu0 0.0
    %1746 = vmatpush1.msra.mxu0 %v1675
    %1747 = vmatprep.subr.mxu0 0.0
    %1748 = vmatpush1.msra.mxu0 %v1676
    %1749 = vmatprep.subr.mxu0 0.0
    %1750 = vmatpush1.msra.mxu0 %v1677
    %1751 = vmatprep.subr.mxu0 0.0
    %1752 = vmatpush1.msra.mxu0 %v1678
    %1753 = vmatprep.subr.mxu0 0.0
    %1754 = vmatpush1.msra.mxu0 %v1679
    %1755 = vmatprep.subr.mxu0 0.0
    %1756 = vmatpush1.msra.mxu0 %v1680
    %1757 = vmatprep.subr.mxu0 0.0
    %1758 = vmatpush1.msra.mxu0 %v1681
    %1759 = vmatprep.subr.mxu0 0.0
    %1760 = vmatpush1.msra.mxu0 %v1682
    %1761 = vmatprep.subr.mxu0 0.0
    %1762 = vmatpush1.msra.mxu0 %v1683
    %1763 = vmatprep.subr.mxu0 0.0
    %1764 = vmatpush1.msra.mxu0 %v1684
    %1765 = vmatprep.subr.mxu0 0.0
    %1766 = vmatpush1.msra.mxu0 %v1685
    %1767 = vmatprep.subr.mxu0 0.0
    %1768 = vmatpush1.msra.mxu0 %v1686
    %1769 = vmatprep.subr.mxu0 0.0
    %1770 = vmatpush1.msra.mxu0 %v1687
    %1771 = vmatprep.mubr.f32.mxu0 %v1651
    %1772 = vmatmul.mubr.f32.gmra.mrb[0].mxu0 %v1650
    %v1773 = vpop.f32.mrb[0].mxu0
    %v1774 = vadd.f32 0.0, %v1773
    %v1775 = vpop.f32.mrb[0].mxu0
    %1776 = vmatprep.mubr.f32.mxu0 %v1654
    %1777 = vmatmul.mubr.f32.gmra.mrb[0].mxu0 %v1653
    %v1778 = vpop.f32.mrb[0].mxu0
    %v1779 = vadd.f32 0.0, %v1778
    %v1780 = vpop.f32.mrb[0].mxu0
    %1781 = vdwg.mxu0
    %1782 = vmatprep.subr.mxu0 0.0
    %1783 = vmatpush1.msra.mxu0 %v1688
    %1784 = vmatprep.subr.mxu0 0.0
    %1785 = vmatpush1.msra.mxu0 %v1689
    %1786 = vmatprep.subr.mxu0 0.0
    %1787 = vmatpush1.msra.mxu0 %v1690
    %1788 = vmatprep.subr.mxu0 0.0
    %1789 = vmatpush1.msra.mxu0 %v1691
    %1790 = vmatprep.subr.mxu0 0.0
    %1791 = vmatpush1.msra.mxu0 %v1692
    %1792 = vmatprep.subr.mxu0 0.0
    %1793 = vmatpush1.msra.mxu0 %v1693
    %1794 = vmatprep.subr.mxu0 0.0
    %1795 = vmatpush1.msra.mxu0 %v1694
    %1796 = vmatprep.subr.mxu0 0.0
    %1797 = vmatpush1.msra.mxu0 %v1695
    %1798 = vmatprep.subr.mxu0 0.0
    %1799 = vmatpush1.msra.mxu0 %v1696
    %1800 = vmatprep.subr.mxu0 0.0
    %1801 = vmatpush1.msra.mxu0 %v1697
    %1802 = vmatprep.subr.mxu0 0.0
    %1803 = vmatpush1.msra.mxu0 %v1698
    %1804 = vmatprep.subr.mxu0 0.0
    %1805 = vmatpush1.msra.mxu0 %v1699
    %1806 = vmatprep.subr.mxu0 0.0
    %1807 = vmatpush1.msra.mxu0 0.0
    %1808 = vmatprep.subr.mxu0 0.0
    %1809 = vmatpush1.msra.mxu0 0.0
    %1810 = vmatprep.subr.mxu0 0.0
    %1811 = vmatpush1.msra.mxu0 0.0
    %1812 = vmatprep.subr.mxu0 0.0
    %1813 = vmatpush1.msra.mxu0 0.0
    %1814 = vmatprep.subr.mxu0 0.0
    %1815 = vmatpush1.msra.mxu0 0.0
    %1816 = vmatprep.subr.mxu0 0.0
    %1817 = vmatpush1.msra.mxu0 0.0
    %1818 = vmatprep.subr.mxu0 0.0
    %1819 = vmatpush1.msra.mxu0 0.0
    %1820 = vmatprep.subr.mxu0 0.0
    %1821 = vmatpush1.msra.mxu0 0.0
    %1822 = vmatprep.subr.mxu0 0.0
    %1823 = vmatpush1.msra.mxu0 0.0
    %1824 = vmatprep.subr.mxu0 0.0
    %1825 = vmatpush1.msra.mxu0 0.0
    %1826 = vmatprep.subr.mxu0 0.0
    %1827 = vmatpush1.msra.mxu0 0.0
    %1828 = vmatprep.subr.mxu0 0.0
    %1829 = vmatpush1.msra.mxu0 0.0
    %1830 = vmatprep.subr.mxu0 0.0
    %1831 = vmatpush1.msra.mxu0 0.0
    %1832 = vmatprep.subr.mxu0 0.0
    %1833 = vmatpush1.msra.mxu0 0.0
    %1834 = vmatprep.subr.mxu0 0.0
    %1835 = vmatpush1.msra.mxu0 0.0
    %1836 = vmatprep.subr.mxu0 0.0
    %1837 = vmatpush1.msra.mxu0 0.0
    %1838 = vmatprep.subr.mxu0 0.0
    %1839 = vmatpush1.msra.mxu0 0.0
    %1840 = vmatprep.subr.mxu0 0.0
    %1841 = vmatpush1.msra.mxu0 0.0
    %1842 = vmatprep.subr.mxu0 0.0
    %1843 = vmatpush1.msra.mxu0 0.0
    %1844 = vmatprep.subr.mxu0 0.0
    %1845 = vmatpush1.msra.mxu0 0.0
    %1846 = vmatprep.mubr.f32.mxu0 0.0
    %1847 = vmatmul.mubr.f32.gmra.mrb[0].mxu0 %v1702
    %v1848 = vpop.f32.mrb[0].mxu0
    %v1849 = vadd.f32 %v1774, %v1848
    %v1850 = vpop.f32.mrb[0].mxu0
    %1851 = vmatprep.mubr.f32.mxu0 0.0
    %1852 = vmatmul.mubr.f32.gmra.mrb[0].mxu0 %v1705
    %v1853 = vpop.f32.mrb[0].mxu0
    %v1854 = vadd.f32 %v1779, %v1853
    %v1855 = vpop.f32.mrb[0].mxu0
    %1856 = vdwg.mxu0
    %v1857 = vsel %vm879, %v1849, 0.0
    %v1858 = vsel %vm879, %v1854, 0.0
    %v1859 = vadd.f32 %v1857, %v1858
    %v1860 = vrot.slane %v1859, 4
    %v1861 = vadd.f32 %v1859, %v1860
    %v1862 = vrot.slane %v1861, 2
    %v1863 = vadd.f32 %v1861, %v1862
    %v1864 = vrot.slane %v1863, 1
    %v1865 = vadd.f32 %v1863, %v1864
    %v1866 = vmul.f32 %v1865, 0.0625
    %v1867 = vmul.f32 %v1849, %v1849
    %v1868 = vmul.f32 %v1854, %v1854
    %v1869 = vsel %vm879, %v1867, 0.0
    %v1870 = vsel %vm879, %v1868, 0.0
    %v1871 = vadd.f32 %v1869, %v1870
    %v1872 = vrot.slane %v1871, 4
    %v1873 = vadd.f32 %v1871, %v1872
    %v1874 = vrot.slane %v1873, 2
    %v1875 = vadd.f32 %v1873, %v1874
    %v1876 = vrot.slane %v1875, 1
    %v1877 = vadd.f32 %v1875, %v1876
    %v1878 = vmul.f32 %v1877, 0.0625
    %v1879 = vmul.f32 %v1866, %v1866
    %v1880 = vsub.f32 %v1878, %v1879
    %v1881 = vsub.f32 %v1849, %v1866
    %v1882 = vsub.f32 %v1854, %v1866
    %v1883 = vld [vmem:[%s8] sm:$0x1]
    %v1884 = vadd.f32 %v1880, 1e-05
    %v1885 = vrsqrt.pop %v1884
    %v1886 = vmul.f32 %v1883, %v1885
    %v1888 = vlaneseq
    %v1889 = vshrl.u32 %v1888, 7
    %v1890 = vsub.s32 0, %v1889
    %v1891 = vrot.slane %v1886, %v1890
    %v1893 = vmul.f32 %v1881, %v1891
    %v1894 = vmul.f32 %v1882, %v1891
    %v1895 = vld [vmem:[%s9] sm:$0x1]
    %v1897 = vlaneseq
    %v1898 = vshrl.u32 %v1897, 7
    %v1899 = vsub.s32 0, %v1898
    %v1900 = vrot.slane %v1895, %v1899
    %v1902 = vadd.f32 %v1893, %v1900
    %v1903 = vadd.f32 %v1894, %v1900
    %vm1904 = vcmp.gt.f32.partialorder %v1902, 0.0
    %vm1905 = vcmp.gt.f32.partialorder %v1903, 0.0
    %v1906 = vmin.f32 %v1902, 0.0
    %v1907 = vmin.f32 %v1903, 0.0
    %v1908 = vmul.f32 %v1906, 1.442695
    %v1909 = vpow.pop %v1908
    %v1910 = vmul.f32 %v1907, 1.442695
    %v1911 = vpow.pop %v1910
    %v1912 = vsub.f32 %v1909, 1.0
    %v1913 = vsub.f32 %v1911, 1.0
    %v1914 = vmul.f32 %v1912, 1.6732632
    %v1915 = vmul.f32 %v1913, 1.6732632
    %v1916 = vsel %vm1904, %v1902, %v1914
    %v1917 = vsel %vm1905, %v1903, %v1915
    %v1918 = vmul.f32 %v1916, 1.050701
    %v1919 = vmul.f32 %v1917, 1.050701
    %v1920 = vsel %vm879, %v1918, 0.0
    %v1921 = vrot.slane %v1920, 4
    %v1922 = vadd.f32 %v1920, %v1921
    %v1923 = vrot.slane %v1922, 2
    %v1924 = vadd.f32 %v1922, %v1923
    %v1925 = vrot.slane %v1924, 1
    %v1926 = vadd.f32 %v1924, %v1925
    %v1927 = vsel %vm879, %v1919, 0.0
    %v1928 = vrot.slane %v1927, 4
    %v1929 = vadd.f32 %v1927, %v1928
    %v1930 = vrot.slane %v1929, 2
    %v1931 = vadd.f32 %v1929, %v1930
    %v1932 = vrot.slane %v1931, 1
    %v1933 = vadd.f32 %v1931, %v1932
    %v1934 = vrcp.pop 8.0
    %v1935 = vmul.f32 %v1926, %v1934
    %v1936 = vmul.f32 %v1933, %v1934
    %v1937 = vld [vmem:[%s12] sm:$0xff]
    %v1938 = vld [vmem:[%s12 + $0x8] sm:$0xff]
    %v1939 = vld [vmem:[%s12 + $0x10] sm:$0xff]
    %v1940 = vld [vmem:[%s12 + $0x18] sm:$0xff]
    %v1941 = vld [vmem:[%s12 + $0x20] sm:$0xff]
    %v1942 = vld [vmem:[%s12 + $0x28] sm:$0xff]
    %v1943 = vld [vmem:[%s12 + $0x30] sm:$0xff]
    %v1944 = vld [vmem:[%s12 + $0x38] sm:$0xff]
    %v1945 = vld [vmem:[%s13] sm:$0x1]
    %v1947 = vlaneseq
    %v1948 = vshrl.u32 %v1947, 7
    %v1949 = vsub.s32 0, %v1948
    %v1950 = vrot.slane %v1945, %v1949
    %vm1954 = vcmask 1041409
    %v1955 = vsel %vm1954, %v1936, %v1935
    %v1956 = vsel %vm879, %v1955, 0
    %1958 = vmatprep.subr.mxu0 0.0
    %1959 = vmatpush1.msra.mxu0 %v1937
    %1960 = vmatprep.subr.mxu0 0.0
    %1961 = vmatpush1.msra.mxu0 %v1938
    %1962 = vmatprep.subr.mxu0 0.0
    %1963 = vmatpush1.msra.mxu0 %v1939
    %1964 = vmatprep.subr.mxu0 0.0
    %1965 = vmatpush1.msra.mxu0 %v1940
    %1966 = vmatprep.subr.mxu0 0.0
    %1967 = vmatpush1.msra.mxu0 %v1941
    %1968 = vmatprep.subr.mxu0 0.0
    %1969 = vmatpush1.msra.mxu0 %v1942
    %1970 = vmatprep.subr.mxu0 0.0
    %1971 = vmatpush1.msra.mxu0 %v1943
    %1972 = vmatprep.subr.mxu0 0.0
    %1973 = vmatpush1.msra.mxu0 %v1944
    %1974 = vmatprep.subr.mxu0 0.0
    %1975 = vmatpush1.msra.mxu0 0.0
    %1976 = vmatprep.subr.mxu0 0.0
    %1977 = vmatpush1.msra.mxu0 0.0
    %1978 = vmatprep.subr.mxu0 0.0
    %1979 = vmatpush1.msra.mxu0 0.0
    %1980 = vmatprep.subr.mxu0 0.0
    %1981 = vmatpush1.msra.mxu0 0.0
    %1982 = vmatprep.subr.mxu0 0.0
    %1983 = vmatpush1.msra.mxu0 0.0
    %1984 = vmatprep.subr.mxu0 0.0
    %1985 = vmatpush1.msra.mxu0 0.0
    %1986 = vmatprep.subr.mxu0 0.0
    %1987 = vmatpush1.msra.mxu0 0.0
    %1988 = vmatprep.subr.mxu0 0.0
    %1989 = vmatpush1.msra.mxu0 0.0
    %1990 = vmatprep.subr.mxu0 0.0
    %1991 = vmatpush1.msra.mxu0 0.0
    %1992 = vmatprep.subr.mxu0 0.0
    %1993 = vmatpush1.msra.mxu0 0.0
    %1994 = vmatprep.subr.mxu0 0.0
    %1995 = vmatpush1.msra.mxu0 0.0
    %1996 = vmatprep.subr.mxu0 0.0
    %1997 = vmatpush1.msra.mxu0 0.0
    %1998 = vmatprep.subr.mxu0 0.0
    %1999 = vmatpush1.msra.mxu0 0.0
    %2000 = vmatprep.subr.mxu0 0.0
    %2001 = vmatpush1.msra.mxu0 0.0
    %2002 = vmatprep.subr.mxu0 0.0
    %2003 = vmatpush1.msra.mxu0 0.0
    %2004 = vmatprep.subr.mxu0 0.0
    %2005 = vmatpush1.msra.mxu0 0.0
    %2006 = vmatprep.subr.mxu0 0.0
    %2007 = vmatpush1.msra.mxu0 0.0
    %2008 = vmatprep.subr.mxu0 0.0
    %2009 = vmatpush1.msra.mxu0 0.0
    %2010 = vmatprep.subr.mxu0 0.0
    %2011 = vmatpush1.msra.mxu0 0.0
    %2012 = vmatprep.subr.mxu0 0.0
    %2013 = vmatpush1.msra.mxu0 0.0
    %2014 = vmatprep.subr.mxu0 0.0
    %2015 = vmatpush1.msra.mxu0 0.0
    %2016 = vmatprep.subr.mxu0 0.0
    %2017 = vmatpush1.msra.mxu0 0.0
    %2018 = vmatprep.subr.mxu0 0.0
    %2019 = vmatpush1.msra.mxu0 0.0
    %2020 = vmatprep.subr.mxu0 0.0
    %2021 = vmatpush1.msra.mxu0 0.0
    %2022 = vmatprep.mubr.f32.mxu0 0.0
    %2023 = vmatmul.mubr.f32.gmra.mrb[0].mxu0 %v1956
    %v2024 = vpop.f32.mrb[0].mxu0
    %v2025 = vadd.f32 %v1950, %v2024
    %v2026 = vpop.f32.mrb[0].mxu0
    %2027 = vdwg.mxu0
    %vm2028 = vcmp.gt.f32.partialorder %v2025, 0.0
    %v2029 = vmin.f32 %v2025, 0.0
    %v2030 = vmul.f32 %v2029, 1.442695
    %v2031 = vpow.pop %v2030
    %v2032 = vsub.f32 %v2031, 1.0
    %v2033 = vmul.f32 %v2032, 1.6732632
    %v2034 = vsel %vm2028, %v2025, %v2033
    %v2035 = vmul.f32 %v2034, 1.050701
    %v2036 = vld [vmem:[%s14] sm:$0xff]
    %v2037 = vld [vmem:[%s14 + $0x8] sm:$0xff]
    %v2038 = vld [vmem:[%s14 + $0x10] sm:$0xff]
    %v2039 = vld [vmem:[%s14 + $0x18] sm:$0xff]
    %v2040 = vld [vmem:[%s14 + $0x20] sm:$0xff]
    %v2041 = vld [vmem:[%s14 + $0x28] sm:$0xff]
    %v2042 = vld [vmem:[%s14 + $0x30] sm:$0xff]
    %v2043 = vld [vmem:[%s14 + $0x38] sm:$0xff]
    %v2044 = vld [vmem:[%s15] sm:$0x1]
    %v2046 = vlaneseq
    %v2047 = vshrl.u32 %v2046, 7
    %v2048 = vsub.s32 0, %v2047
    %v2049 = vrot.slane %v2044, %v2048
    %v2052 = vsel %vm879, %v2035, 0
    %2054 = vmatprep.subr.mxu0 0.0
    %2055 = vmatpush1.msra.mxu0 %v2036
    %2056 = vmatprep.subr.mxu0 0.0
    %2057 = vmatpush1.msra.mxu0 %v2037
    %2058 = vmatprep.subr.mxu0 0.0
    %2059 = vmatpush1.msra.mxu0 %v2038
    %2060 = vmatprep.subr.mxu0 0.0
    %2061 = vmatpush1.msra.mxu0 %v2039
    %2062 = vmatprep.subr.mxu0 0.0
    %2063 = vmatpush1.msra.mxu0 %v2040
    %2064 = vmatprep.subr.mxu0 0.0
    %2065 = vmatpush1.msra.mxu0 %v2041
    %2066 = vmatprep.subr.mxu0 0.0
    %2067 = vmatpush1.msra.mxu0 %v2042
    %2068 = vmatprep.subr.mxu0 0.0
    %2069 = vmatpush1.msra.mxu0 %v2043
    %2070 = vmatprep.subr.mxu0 0.0
    %2071 = vmatpush1.msra.mxu0 0.0
    %2072 = vmatprep.subr.mxu0 0.0
    %2073 = vmatpush1.msra.mxu0 0.0
    %2074 = vmatprep.subr.mxu0 0.0
    %2075 = vmatpush1.msra.mxu0 0.0
    %2076 = vmatprep.subr.mxu0 0.0
    %2077 = vmatpush1.msra.mxu0 0.0
    %2078 = vmatprep.subr.mxu0 0.0
    %2079 = vmatpush1.msra.mxu0 0.0
    %2080 = vmatprep.subr.mxu0 0.0
    %2081 = vmatpush1.msra.mxu0 0.0
    %2082 = vmatprep.subr.mxu0 0.0
    %2083 = vmatpush1.msra.mxu0 0.0
    %2084 = vmatprep.subr.mxu0 0.0
    %2085 = vmatpush1.msra.mxu0 0.0
    %2086 = vmatprep.subr.mxu0 0.0
    %2087 = vmatpush1.msra.mxu0 0.0
    %2088 = vmatprep.subr.mxu0 0.0
    %2089 = vmatpush1.msra.mxu0 0.0
    %2090 = vmatprep.subr.mxu0 0.0
    %2091 = vmatpush1.msra.mxu0 0.0
    %2092 = vmatprep.subr.mxu0 0.0
    %2093 = vmatpush1.msra.mxu0 0.0
    %2094 = vmatprep.subr.mxu0 0.0
    %2095 = vmatpush1.msra.mxu0 0.0
    %2096 = vmatprep.subr.mxu0 0.0
    %2097 = vmatpush1.msra.mxu0 0.0
    %2098 = vmatprep.subr.mxu0 0.0
    %2099 = vmatpush1.msra.mxu0 0.0
    %2100 = vmatprep.subr.mxu0 0.0
    %2101 = vmatpush1.msra.mxu0 0.0
    %2102 = vmatprep.subr.mxu0 0.0
    %2103 = vmatpush1.msra.mxu0 0.0
    %2104 = vmatprep.subr.mxu0 0.0
    %2105 = vmatpush1.msra.mxu0 0.0
    %2106 = vmatprep.subr.mxu0 0.0
    %2107 = vmatpush1.msra.mxu0 0.0
    %2108 = vmatprep.subr.mxu0 0.0
    %2109 = vmatpush1.msra.mxu0 0.0
    %2110 = vmatprep.subr.mxu0 0.0
    %2111 = vmatpush1.msra.mxu0 0.0
    %2112 = vmatprep.subr.mxu0 0.0
    %2113 = vmatpush1.msra.mxu0 0.0
    %2114 = vmatprep.subr.mxu0 0.0
    %2115 = vmatpush1.msra.mxu0 0.0
    %2116 = vmatprep.subr.mxu0 0.0
    %2117 = vmatpush1.msra.mxu0 0.0
    %2118 = vmatprep.mubr.f32.mxu0 0.0
    %2119 = vmatmul.mubr.f32.gmra.mrb[0].mxu0 %v2052
    %v2120 = vpop.f32.mrb[0].mxu0
    %v2121 = vadd.f32 %v2049, %v2120
    %v2122 = vpop.f32.mrb[0].mxu0
    %2123 = vdwg.mxu0
    %vm2124 = vcmp.gt.f32.partialorder %v2121, 0.0
    %v2125 = vmin.f32 %v2121, 0.0
    %v2126 = vmul.f32 %v2125, 1.442695
    %v2127 = vpow.pop %v2126
    %v2128 = vsub.f32 %v2127, 1.0
    %v2129 = vmul.f32 %v2128, 1.6732632
    %v2130 = vsel %vm2124, %v2121, %v2129
    %v2131 = vmul.f32 %v2130, 1.050701
    %v2132 = vld [vmem:[%s16] sm:$0xff]
    %v2133 = vld [vmem:[%s16 + $0x8] sm:$0xff]
    %v2134 = vld [vmem:[%s16 + $0x10] sm:$0xff]
    %v2135 = vld [vmem:[%s16 + $0x18] sm:$0xff]
    %v2136 = vld [vmem:[%s16 + $0x20] sm:$0xff]
    %v2137 = vld [vmem:[%s16 + $0x28] sm:$0xff]
    %v2138 = vld [vmem:[%s16 + $0x30] sm:$0xff]
    %v2139 = vld [vmem:[%s16 + $0x38] sm:$0xff]
    %v2140 = vld [vmem:[%s17] sm:$0x1]
    %v2142 = vlaneseq
    %v2143 = vshrl.u32 %v2142, 7
    %v2144 = vsub.s32 0, %v2143
    %v2145 = vrot.slane %v2140, %v2144
    %v2148 = vsel %vm879, %v2131, 0
    %2150 = vmatprep.subr.mxu0 0.0
    %2151 = vmatpush1.msra.mxu0 %v2132
    %2152 = vmatprep.subr.mxu0 0.0
    %2153 = vmatpush1.msra.mxu0 %v2133
    %2154 = vmatprep.subr.mxu0 0.0
    %2155 = vmatpush1.msra.mxu0 %v2134
    %2156 = vmatprep.subr.mxu0 0.0
    %2157 = vmatpush1.msra.mxu0 %v2135
    %2158 = vmatprep.subr.mxu0 0.0
    %2159 = vmatpush1.msra.mxu0 %v2136
    %2160 = vmatprep.subr.mxu0 0.0
    %2161 = vmatpush1.msra.mxu0 %v2137
    %2162 = vmatprep.subr.mxu0 0.0
    %2163 = vmatpush1.msra.mxu0 %v2138
    %2164 = vmatprep.subr.mxu0 0.0
    %2165 = vmatpush1.msra.mxu0 %v2139
    %2166 = vmatprep.subr.mxu0 0.0
    %2167 = vmatpush1.msra.mxu0 0.0
    %2168 = vmatprep.subr.mxu0 0.0
    %2169 = vmatpush1.msra.mxu0 0.0
    %2170 = vmatprep.subr.mxu0 0.0
    %2171 = vmatpush1.msra.mxu0 0.0
    %2172 = vmatprep.subr.mxu0 0.0
    %2173 = vmatpush1.msra.mxu0 0.0
    %2174 = vmatprep.subr.mxu0 0.0
    %2175 = vmatpush1.msra.mxu0 0.0
    %2176 = vmatprep.subr.mxu0 0.0
    %2177 = vmatpush1.msra.mxu0 0.0
    %2178 = vmatprep.subr.mxu0 0.0
    %2179 = vmatpush1.msra.mxu0 0.0
    %2180 = vmatprep.subr.mxu0 0.0
    %2181 = vmatpush1.msra.mxu0 0.0
    %2182 = vmatprep.subr.mxu0 0.0
    %2183 = vmatpush1.msra.mxu0 0.0
    %2184 = vmatprep.subr.mxu0 0.0
    %2185 = vmatpush1.msra.mxu0 0.0
    %2186 = vmatprep.subr.mxu0 0.0
    %2187 = vmatpush1.msra.mxu0 0.0
    %2188 = vmatprep.subr.mxu0 0.0
    %2189 = vmatpush1.msra.mxu0 0.0
    %2190 = vmatprep.subr.mxu0 0.0
    %2191 = vmatpush1.msra.mxu0 0.0
    %2192 = vmatprep.subr.mxu0 0.0
    %2193 = vmatpush1.msra.mxu0 0.0
    %2194 = vmatprep.subr.mxu0 0.0
    %2195 = vmatpush1.msra.mxu0 0.0
    %2196 = vmatprep.subr.mxu0 0.0
    %2197 = vmatpush1.msra.mxu0 0.0
    %2198 = vmatprep.subr.mxu0 0.0
    %2199 = vmatpush1.msra.mxu0 0.0
    %2200 = vmatprep.subr.mxu0 0.0
    %2201 = vmatpush1.msra.mxu0 0.0
    %2202 = vmatprep.subr.mxu0 0.0
    %2203 = vmatpush1.msra.mxu0 0.0
    %2204 = vmatprep.subr.mxu0 0.0
    %2205 = vmatpush1.msra.mxu0 0.0
    %2206 = vmatprep.subr.mxu0 0.0
    %2207 = vmatpush1.msra.mxu0 0.0
    %2208 = vmatprep.subr.mxu0 0.0
    %2209 = vmatpush1.msra.mxu0 0.0
    %2210 = vmatprep.subr.mxu0 0.0
    %2211 = vmatpush1.msra.mxu0 0.0
    %2212 = vmatprep.subr.mxu0 0.0
    %2213 = vmatpush1.msra.mxu0 0.0
    %2214 = vmatprep.mubr.f32.mxu0 0.0
    %2215 = vmatmul.mubr.f32.gmra.mrb[0].mxu0 %v2148
    %v2216 = vpop.f32.mrb[0].mxu0
    %v2217 = vadd.f32 %v2145, %v2216
    %v2218 = vpop.f32.mrb[0].mxu0
    %2219 = vdwg.mxu0
    %vm2220 = vcmask 74752
    %2221 = vst.msk [vmem:[#allocation7] sm:$0x3] %vm2220, %v2217
    // Predicated region
    $region74: #{tpu_custom_call.1} parent=1 // pred_check
      _
    $region75: #{tpu_custom_call.1} parent=1 // pred_check_branch
      %2223 = sbr.rel (0) target = $region77
    $region76: #{tpu_custom_call.1} parent=1 // pred_region
      %s2225 = ssub.s32 32, 32
      %2226 = vsyncadd [#allocation8], %s2225
      %s2228 = sshll.u32 [#allocation7], 4
      %s2229 = int_to_ptr.vmem [resolvable:$true] %s2228
      %2231 = dma.vmem_to_hbm [thread:$0]  %s2229, 32, %s18, [#allocation8]
    $region77: #{tpu_custom_call.1} parent=1 // pred_fallthru
      _
    // Predicated region
    $region78: #{tpu_custom_call.1} parent=1 // pred_check
      _
    $region79: #{tpu_custom_call.1} parent=1 // pred_check_branch
      %2233 = sbr.rel (0) target = $region81
    $region80: #{tpu_custom_call.1} parent=1 // pred_region
      %2234 = dma.done [#allocation8], 32
    $region81: #{tpu_custom_call.1} parent=1 // pred_fallthru
      _
    %2235 = vsyncpa [#allocation8], 1

</llo_original>
